<compile_context>
chip_gen: v5e
topology: v5e:2x2
jax: 0.10.0
libtpu: 0.0.40
codegen_flags: <defaults>
</compile_context>

<pallas_src>
import math
from functools import partial

import numpy as np
import jax
import jax.numpy as jnp
from jax.experimental import pallas as pl
from jax.experimental.pallas import tpu as pltpu


PARAM_ORDER = ("wq", "bq", "wk", "bk", "wv", "bv", "wo", "bo",
               "ln1_g", "ln1_b", "w1", "b1", "w2", "b2", "ln2_g", "ln2_b")


# ---------------------------------------------------------------------------
# Fused kernel: grid = (batch_tiles, n_layers).  The output block (same block
# index across the layer axis) is the VMEM-resident running activation.
# ---------------------------------------------------------------------------
def fused_encoder_kernel(x_ref, bias_ref,
                         wq_ref, bq_ref, wk_ref, bk_ref, wv_ref, bv_ref,
                         wo_ref, bo_ref, ln1_g_ref, ln1_b_ref,
                         w1_ref, b1_ref, w2_ref, b2_ref,
                         ln2_g_ref, ln2_b_ref,
                         out_ref,
                         *, batch, seq, num_heads, d_k, d_v, eps, compute_dtype):
    # Layer 0 for this batch tile: seed the resident activation from x.
    @pl.when(pl.program_id(1) == 0)
    def _():
        out_ref[...] = x_ref[...]

    x = out_ref[...]                              # (batch*seq, D) f32 running state
    xm = x.astype(compute_dtype)                  # bf16 (or f32) at the MXU inputs
    bias = bias_ref[...]                          # (batch, 1, seq) additive key-mask bias
    scale = jnp.float32(1.0 / math.sqrt(d_k))
    n = batch * seq

    # ---- Multi-head attention (heads selected on major ref axes only) -----
    attn = jnp.zeros_like(x)                      # (n, D) f32, per-head Wo accumulated
    for h in range(num_heads):                    # static unroll over heads
        q = (jnp.dot(xm, wq_ref[0, h], preferred_element_type=jnp.float32)
             + bq_ref[0, h]) * scale
        k = jnp.dot(xm, wk_ref[0, h], preferred_element_type=jnp.float32) + bk_ref[0, h]
        v = jnp.dot(xm, wv_ref[0, h], preferred_element_type=jnp.float32) + bv_ref[0, h]
        qb = q.reshape(batch, seq, d_k).astype(compute_dtype)
        kb = k.reshape(batch, seq, d_k).astype(compute_dtype)
        vb = v.reshape(batch, seq, d_v).astype(compute_dtype)

        s = jnp.einsum("bqd,bkd->bqk", qb, kb,
                       preferred_element_type=jnp.float32) + bias      # (batch,S,S) f32
        s = s - jnp.max(s, axis=-1, keepdims=True)
        p = jnp.exp(s)
        inv_l = pl.reciprocal(jnp.sum(p, axis=-1, keepdims=True), approx=True)
        pv = jnp.einsum("bqk,bkd->bqd", p.astype(compute_dtype), vb,
                        preferred_element_type=jnp.float32)
        pv = pv * inv_l                                                 # normalize post-PV
        attn = attn + jnp.dot(pv.reshape(n, d_v).astype(compute_dtype), wo_ref[0, h],
                              preferred_element_type=jnp.float32)
    attn = attn + bo_ref[0]

    # dropout_layer_1 is identity at inference time
    h1 = x + attn
    mu1 = jnp.mean(h1, axis=-1, keepdims=True)
    var1 = jnp.mean((h1 - mu1) ** 2, axis=-1, keepdims=True)
    h1 = (h1 - mu1) * jax.lax.rsqrt(var1 + eps) * ln1_g_ref[0] + ln1_b_ref[0]

    # ---- Pointwise feed-forward: Linear -> ReLU -> Linear ------------------
    ff = jnp.dot(h1.astype(compute_dtype), w1_ref[0],
                 preferred_element_type=jnp.float32) + b1_ref[0]
    ff = jnp.maximum(ff, 0.0)
    ff = jnp.dot(ff.astype(compute_dtype), w2_ref[0],
                 preferred_element_type=jnp.float32) + b2_ref[0]

    # dropout_layer_2 is identity at inference time
    h2 = h1 + ff
    mu2 = jnp.mean(h2, axis=-1, keepdims=True)
    var2 = jnp.mean((h2 - mu2) ** 2, axis=-1, keepdims=True)
    h2 = (h2 - mu2) * jax.lax.rsqrt(var2 + eps) * ln2_g_ref[0] + ln2_b_ref[0]

    out_ref[...] = h2


# ---------------------------------------------------------------------------
# Wrapper: one pallas_call for the whole encoder stack.
# ---------------------------------------------------------------------------
def encoder_forward(x, mask, params, *, num_heads, d_k, d_v,
                    batch_block=None, eps=1e-5, interpret=False):
    B, S, D = x.shape
    L = params["wq"].shape[0]
    if batch_block is None:
        batch_block = B           # fold full batch (best on single-TC v5e/v6e)
        # NOTE: on v7x set batch_block = B // 2 so the "parallel" batch-tile
        # axis feeds both TensorCores.
    assert B % batch_block == 0
    n_btiles = B // batch_block
    N = batch_block * S

    x_flat = x.reshape(B * S, D).astype(jnp.float32)
    # Additive attention bias computed ONCE here (hoisted out of the kernel's
    # per-head / per-layer work): 0 for valid keys, -1e9 for padded keys.
    attn_bias = jnp.where(mask > 0.5, 0.0, -1e9).astype(jnp.float32)   # (B, 1, S)

    plist = [params[name] for name in PARAM_ORDER]
    compute_dtype = params["wq"].dtype

    def layer_spec(arr):
        nd = arr.ndim
        return pl.BlockSpec((1,) + arr.shape[1:],
                            lambda b, l, _nd=nd: (l,) + (0,) * (_nd - 1))

    in_specs = [
        pl.BlockSpec((N, D), lambda b, l: (b, 0)),              # activation tile (resident)
        pl.BlockSpec((batch_block, 1, S), lambda b, l: (b, 0, 0)),  # mask bias (resident)
    ] + [layer_spec(p) for p in plist]

    kernel = partial(fused_encoder_kernel,
                     batch=batch_block, seq=S, num_heads=num_heads,
                     d_k=d_k, d_v=d_v, eps=eps, compute_dtype=compute_dtype)

    out = pl.pallas_call(
        kernel,
        out_shape=jax.ShapeDtypeStruct((B * S, D), jnp.float32),
        grid=(n_btiles, L),
        in_specs=in_specs,
        # Same block index across the layer axis -> resident accumulator,
        # written back to HBM once per batch tile (lane-dense for real
        # d_model that is a multiple of 128).
        out_specs=pl.BlockSpec((N, D), lambda b, l: (b, 0)),
        compiler_params=pltpu.CompilerParams(
            dimension_semantics=("parallel", "arbitrary")),
        interpret=interpret,
    )(x_flat, attn_bias, *plist)
    return out.reshape(B, S, D).astype(x.dtype)


# ---------------------------------------------------------------------------
# Parameter preprocessing: stack layers, split heads onto major axes, and cast
# matmul weights to the compute dtype (biases / LayerNorm params stay f32).
# ---------------------------------------------------------------------------
def prepare_params(block_params, *, num_heads, d_k, d_v,
                   compute_dtype=jnp.bfloat16):
    L = len(block_params)
    stacked = {k: jnp.stack([bp[k] for bp in block_params], axis=0)
               for k in block_params[0]}
    D = stacked["wq"].shape[1]

    def split_in(w, d):      # (L, D, H*d)  -> (L, H, D, d)
        return jnp.transpose(w.reshape(L, D, num_heads, d), (0, 2, 1, 3))

    def split_bias(b, d):    # (L, 1, H*d)  -> (L, H, 1, d)
        return jnp.transpose(b.reshape(L, 1, num_heads, d), (0, 2, 1, 3))

    def split_out(w):        # (L, H*d_v, D) -> (L, H, d_v, D)
        return w.reshape(L, num_heads, d_v, D)

    cd = compute_dtype
    f32 = jnp.float32
    return {
        "wq": split_in(stacked["wq"], d_k).astype(cd),
        "bq": split_bias(stacked["bq"], d_k).astype(f32),
        "wk": split_in(stacked["wk"], d_k).astype(cd),
        "bk": split_bias(stacked["bk"], d_k).astype(f32),
        "wv": split_in(stacked["wv"], d_v).astype(cd),
        "bv": split_bias(stacked["bv"], d_v).astype(f32),
        "wo": split_out(stacked["wo"]).astype(cd),
        "bo": stacked["bo"].astype(f32),
        "ln1_g": stacked["ln1_g"].astype(f32),
        "ln1_b": stacked["ln1_b"].astype(f32),
        "w1": stacked["w1"].astype(cd),
        "b1": stacked["b1"].astype(f32),
        "w2": stacked["w2"].astype(cd),
        "b2": stacked["b2"].astype(f32),
        "ln2_g": stacked["ln2_g"].astype(f32),
        "ln2_b": stacked["ln2_b"].astype(f32),
    }


# ---------------------------------------------------------------------------
# Pure-JAX reference mirroring the kernel's numerics (bf16 at matmul inputs,
# f32 accumulation, f32 softmax / LayerNorm) for validation.
# ---------------------------------------------------------------------------
def reference_forward(x, mask, sp, *, num_heads, d_k, d_v, eps=1e-5):
    B, S, D = x.shape
    L = sp["wq"].shape[0]
    cd = sp["wq"].dtype
    bias = jnp.where(mask > 0.5, 0.0, -1e9).astype(jnp.float32)     # (B, 1, S)
    scale = 1.0 / math.sqrt(d_k)
    h = x.reshape(B * S, D).astype(jnp.float32)

    def ln(z, g, b):
        mu = jnp.mean(z, axis=-1, keepdims=True)
        var = jnp.mean((z - mu) ** 2, axis=-1, keepdims=True)
        return (z - mu) * jax.lax.rsqrt(var + eps) * g + b

    for l in range(L):
        xm = h.astype(cd)
        attn = jnp.zeros_like(h)
        for hd in range(num_heads):
            q = (jnp.dot(xm, sp["wq"][l, hd], preferred_element_type=jnp.float32)
                 + sp["bq"][l, hd]) * scale
            k = jnp.dot(xm, sp["wk"][l, hd], preferred_element_type=jnp.float32) + sp["bk"][l, hd]
            v = jnp.dot(xm, sp["wv"][l, hd], preferred_element_type=jnp.float32) + sp["bv"][l, hd]
            qb = q.reshape(B, S, d_k).astype(cd)
            kb = k.reshape(B, S, d_k).astype(cd)
            vb = v.reshape(B, S, d_v).astype(cd)
            s = jnp.einsum("bqd,bkd->bqk", qb, kb,
                           preferred_element_type=jnp.float32) + bias
            s = s - jnp.max(s, axis=-1, keepdims=True)
            p = jnp.exp(s)
            denom = jnp.sum(p, axis=-1, keepdims=True)
            pv = jnp.einsum("bqk,bkd->bqd", p.astype(cd), vb,
                            preferred_element_type=jnp.float32) / denom
            attn = attn + jnp.dot(pv.reshape(B * S, d_v).astype(cd), sp["wo"][l, hd],
                                  preferred_element_type=jnp.float32)
        attn = attn + sp["bo"][l]
        h1 = ln(h + attn, sp["ln1_g"][l], sp["ln1_b"][l])
        ff = jnp.dot(h1.astype(cd), sp["w1"][l], preferred_element_type=jnp.float32) + sp["b1"][l]
        ff = jnp.maximum(ff, 0.0)
        ff = jnp.dot(ff.astype(cd), sp["w2"][l], preferred_element_type=jnp.float32) + sp["b2"][l]
        h = ln(h1 + ff, sp["ln2_g"][l], sp["ln2_b"][l])
    return h.reshape(B, S, D)


# ---------------------------------------------------------------------------
# Deterministic parameter init (mirrors the shapes of the PyTorch module).
# ---------------------------------------------------------------------------
def init_block_params(key, d_model, d_k, d_v, d_ff, num_heads):
    hdk, hdv = num_heads * d_k, num_heads * d_v
    ks = jax.random.split(key, 8)
    s = 0.05
    return {
        "wq": s * jax.random.normal(ks[0], (d_model, hdk), jnp.float32),
        "bq": jnp.zeros((1, hdk), jnp.float32),
        "wk": s * jax.random.normal(ks[1], (d_model, hdk), jnp.float32),
        "bk": jnp.zeros((1, hdk), jnp.float32),
        "wv": s * jax.random.normal(ks[2], (d_model, hdv), jnp.float32),
        "bv": jnp.zeros((1, hdv), jnp.float32),
        "wo": s * jax.random.normal(ks[3], (hdv, d_model), jnp.float32),
        "bo": jnp.zeros((1, d_model), jnp.float32),
        "ln1_g": jnp.ones((1, d_model), jnp.float32),
        "ln1_b": jnp.zeros((1, d_model), jnp.float32),
        "w1": s * jax.random.normal(ks[4], (d_model, d_ff), jnp.float32),
        "b1": 0.01 * jax.random.normal(ks[5], (1, d_ff), jnp.float32),
        "w2": s * jax.random.normal(ks[6], (d_ff, d_model), jnp.float32),
        "b2": 0.01 * jax.random.normal(ks[7], (1, d_model), jnp.float32),
        "ln2_g": jnp.ones((1, d_model), jnp.float32),
        "ln2_b": jnp.zeros((1, d_model), jnp.float32),
    }


if __name__ == "__main__":
    # Small shapes consistent with the module (scaled-down transformer encoder).
    B, S = 2, 8
    d_model, d_k, d_v, d_ff, num_heads, n_blocks = 32, 8, 8, 64, 4, 2

    key = jax.random.PRNGKey(0)
    kx, kp = jax.random.split(key)
    x = jax.random.normal(kx, (B, S, d_model), jnp.float32)

    # mask: 1 = valid, 0 = pad (batch 1 has its last two key positions padded)
    mask_np = np.ones((B, 1, S), np.float32)
    mask_np[1, 0, -2:] = 0.0
    mask = jnp.asarray(mask_np)

    block_keys = jax.random.split(kp, n_blocks)
    block_params = [init_block_params(bk, d_model, d_k, d_v, d_ff, num_heads)
                    for bk in block_keys]
    params = prepare_params(block_params, num_heads=num_heads, d_k=d_k, d_v=d_v,
                            compute_dtype=jnp.bfloat16)

    out = encoder_forward(x, mask, params, num_heads=num_heads, d_k=d_k, d_v=d_v)
    out = jax.block_until_ready(out)

    # Validate against a pure-JAX reference with matching matmul dtypes.
    ref = reference_forward(x, mask, params, num_heads=num_heads, d_k=d_k, d_v=d_v)
    np.testing.assert_allclose(np.asarray(out), np.asarray(ref), rtol=5e-3, atol=5e-3)

    print("KERNEL_OK")
</pallas_src>

<mosaic_0001>
module attributes {stable_mosaic.version = 11 : i64} {
  func.func @fused_encoder_kernel(%arg0: i32, %arg1: i32, %arg2: memref<16x32xf32, #tpu.memory_space<vmem>>, %arg3: memref<2x1x8xf32, #tpu.memory_space<vmem>>, %arg4: memref<1x4x32x8xbf16, #tpu.memory_space<vmem>>, %arg5: memref<1x4x1x8xf32, #tpu.memory_space<vmem>>, %arg6: memref<1x4x32x8xbf16, #tpu.memory_space<vmem>>, %arg7: memref<1x4x1x8xf32, #tpu.memory_space<vmem>>, %arg8: memref<1x4x32x8xbf16, #tpu.memory_space<vmem>>, %arg9: memref<1x4x1x8xf32, #tpu.memory_space<vmem>>, %arg10: memref<1x4x8x32xbf16, #tpu.memory_space<vmem>>, %arg11: memref<1x1x32xf32, #tpu.memory_space<vmem>>, %arg12: memref<1x1x32xf32, #tpu.memory_space<vmem>>, %arg13: memref<1x1x32xf32, #tpu.memory_space<vmem>>, %arg14: memref<1x32x64xbf16, #tpu.memory_space<vmem>>, %arg15: memref<1x1x64xf32, #tpu.memory_space<vmem>>, %arg16: memref<1x64x32xbf16, #tpu.memory_space<vmem>>, %arg17: memref<1x1x32xf32, #tpu.memory_space<vmem>>, %arg18: memref<1x1x32xf32, #tpu.memory_space<vmem>>, %arg19: memref<1x1x32xf32, #tpu.memory_space<vmem>>, %arg20: memref<16x32xf32, #tpu.memory_space<vmem>>) attributes {dimension_semantics = [#tpu.dimension_semantics<parallel>, #tpu.dimension_semantics<arbitrary>], iteration_bounds = array<i64: 1, 2>, scalar_prefetch = 0 : i64, scratch_operands = 0 : i64, tpu.core_type = #tpu.core_type<tc>, window_params = [{transform_indices = @transform_0, window_bounds = array<i64: 16, 32>}, {transform_indices = @transform_1, window_bounds = array<i64: 2, 1, 8>}, {transform_indices = @transform_2, window_bounds = array<i64: 1, 4, 32, 8>}, {transform_indices = @transform_3, window_bounds = array<i64: 1, 4, 1, 8>}, {transform_indices = @transform_4, window_bounds = array<i64: 1, 4, 32, 8>}, {transform_indices = @transform_5, window_bounds = array<i64: 1, 4, 1, 8>}, {transform_indices = @transform_6, window_bounds = array<i64: 1, 4, 32, 8>}, {transform_indices = @transform_7, window_bounds = array<i64: 1, 4, 1, 8>}, {transform_indices = @transform_8, window_bounds = array<i64: 1, 4, 8, 32>}, {transform_indices = @transform_9, window_bounds = array<i64: 1, 1, 32>}, {transform_indices = @transform_10, window_bounds = array<i64: 1, 1, 32>}, {transform_indices = @transform_11, window_bounds = array<i64: 1, 1, 32>}, {transform_indices = @transform_12, window_bounds = array<i64: 1, 32, 64>}, {transform_indices = @transform_13, window_bounds = array<i64: 1, 1, 64>}, {transform_indices = @transform_14, window_bounds = array<i64: 1, 64, 32>}, {transform_indices = @transform_15, window_bounds = array<i64: 1, 1, 32>}, {transform_indices = @transform_16, window_bounds = array<i64: 1, 1, 32>}, {transform_indices = @transform_17, window_bounds = array<i64: 1, 1, 32>}, {transform_indices = @transform_18, window_bounds = array<i64: 16, 32>}]} {
    %c0_i32 = arith.constant 0 : i32
    %0 = arith.cmpi eq, %arg1, %c0_i32 : i32
    %1 = arith.extui %0 : i1 to i32
    %c0_i32_0 = arith.constant 0 : i32
    %2 = arith.cmpi ne, %1, %c0_i32_0 : i32
    scf.if %2 {
      %c0_192 = arith.constant 0 : index
      %c0_193 = arith.constant 0 : index
      %284 = vector.load %arg2[%c0_192, %c0_193] : memref<16x32xf32, #tpu.memory_space<vmem>>, vector<16x32xf32>
      %c0_194 = arith.constant 0 : index
      %c0_195 = arith.constant 0 : index
      %285 = vector.load %arg20[%c0_194, %c0_195] : memref<16x32xf32, #tpu.memory_space<vmem>>, vector<16x32xf32>
      tpu.vector_store %arg20[%c0_194, %c0_195], %284 {strides = array<i32>} : memref<16x32xf32, #tpu.memory_space<vmem>>, vector<16x32xf32>,
    } else {
    }
    %c0 = arith.constant 0 : index
    %c0_1 = arith.constant 0 : index
    %3 = vector.load %arg20[%c0, %c0_1] : memref<16x32xf32, #tpu.memory_space<vmem>>, vector<16x32xf32>
    %4 = arith.truncf %3 : vector<16x32xf32> to vector<16x32xbf16>
    %c0_2 = arith.constant 0 : index
    %c0_3 = arith.constant 0 : index
    %c0_4 = arith.constant 0 : index
    %5 = vector.load %arg3[%c0_2, %c0_3, %c0_4] : memref<2x1x8xf32, #tpu.memory_space<vmem>>, vector<2x1x8xf32>
    %cst = arith.constant 0.000000e+00 : f32
    %6 = vector.broadcast %cst : f32 to vector<16x32xf32>
    %c0_5 = arith.constant 0 : index
    %c0_6 = arith.constant 0 : index
    %c0_7 = arith.constant 0 : index
    %c0_8 = arith.constant 0 : index
    %7 = vector.load %arg4[%c0_5, %c0_6, %c0_7, %c0_8] : memref<1x4x32x8xbf16, #tpu.memory_space<vmem>>, vector<1x1x32x8xbf16>
    %8 = vector.shape_cast %7 : vector<1x1x32x8xbf16> to vector<32x8xbf16>
    %cst_9 = arith.constant dense<0.000000e+00> : vector<16x8xf32>
    %9 = tpu.matmul %4, %8, %cst_9 {dimension_numbers = #tpu.dot_dimension_numbers<[1], [0], [0], [1], [0, 0, 1, 1], [], []>} : vector<16x32xbf16>, vector<32x8xbf16>, vector<16x8xf32> -> vector<16x8xf32>
    %c0_10 = arith.constant 0 : index
    %c0_11 = arith.constant 0 : index
    %c0_12 = arith.constant 0 : index
    %c0_13 = arith.constant 0 : index
    %10 = vector.load %arg5[%c0_10, %c0_11, %c0_12, %c0_13] : memref<1x4x1x8xf32, #tpu.memory_space<vmem>>, vector<1x1x1x8xf32>
    %11 = vector.shape_cast %10 : vector<1x1x1x8xf32> to vector<1x8xf32>
    %12 = vector.broadcast %11 : vector<1x8xf32> to vector<16x8xf32>
    %13 = arith.addf %9, %12 : vector<16x8xf32>
    %cst_14 = arith.constant 0.353553385 : f32
    %14 = vector.broadcast %cst_14 : f32 to vector<16x8xf32>
    %15 = arith.mulf %13, %14 : vector<16x8xf32>
    %c0_15 = arith.constant 0 : index
    %c0_16 = arith.constant 0 : index
    %c0_17 = arith.constant 0 : index
    %c0_18 = arith.constant 0 : index
    %16 = vector.load %arg6[%c0_15, %c0_16, %c0_17, %c0_18] : memref<1x4x32x8xbf16, #tpu.memory_space<vmem>>, vector<1x1x32x8xbf16>
    %17 = vector.shape_cast %16 : vector<1x1x32x8xbf16> to vector<32x8xbf16>
    %cst_19 = arith.constant dense<0.000000e+00> : vector<16x8xf32>
    %18 = tpu.matmul %4, %17, %cst_19 {dimension_numbers = #tpu.dot_dimension_numbers<[1], [0], [0], [1], [0, 0, 1, 1], [], []>} : vector<16x32xbf16>, vector<32x8xbf16>, vector<16x8xf32> -> vector<16x8xf32>
    %c0_20 = arith.constant 0 : index
    %c0_21 = arith.constant 0 : index
    %c0_22 = arith.constant 0 : index
    %c0_23 = arith.constant 0 : index
    %19 = vector.load %arg7[%c0_20, %c0_21, %c0_22, %c0_23] : memref<1x4x1x8xf32, #tpu.memory_space<vmem>>, vector<1x1x1x8xf32>
    %20 = vector.shape_cast %19 : vector<1x1x1x8xf32> to vector<1x8xf32>
    %21 = vector.broadcast %20 : vector<1x8xf32> to vector<16x8xf32>
    %22 = arith.addf %18, %21 : vector<16x8xf32>
    %c0_24 = arith.constant 0 : index
    %c0_25 = arith.constant 0 : index
    %c0_26 = arith.constant 0 : index
    %c0_27 = arith.constant 0 : index
    %23 = vector.load %arg8[%c0_24, %c0_25, %c0_26, %c0_27] : memref<1x4x32x8xbf16, #tpu.memory_space<vmem>>, vector<1x1x32x8xbf16>
    %24 = vector.shape_cast %23 : vector<1x1x32x8xbf16> to vector<32x8xbf16>
    %cst_28 = arith.constant dense<0.000000e+00> : vector<16x8xf32>
    %25 = tpu.matmul %4, %24, %cst_28 {dimension_numbers = #tpu.dot_dimension_numbers<[1], [0], [0], [1], [0, 0, 1, 1], [], []>} : vector<16x32xbf16>, vector<32x8xbf16>, vector<16x8xf32> -> vector<16x8xf32>
    %c0_29 = arith.constant 0 : index
    %c0_30 = arith.constant 0 : index
    %c0_31 = arith.constant 0 : index
    %c0_32 = arith.constant 0 : index
    %26 = vector.load %arg9[%c0_29, %c0_30, %c0_31, %c0_32] : memref<1x4x1x8xf32, #tpu.memory_space<vmem>>, vector<1x1x1x8xf32>
    %27 = vector.shape_cast %26 : vector<1x1x1x8xf32> to vector<1x8xf32>
    %28 = vector.broadcast %27 : vector<1x8xf32> to vector<16x8xf32>
    %29 = arith.addf %25, %28 : vector<16x8xf32>
    %30 = vector.shape_cast %15 : vector<16x8xf32> to vector<2x8x8xf32>
    %31 = arith.truncf %30 : vector<2x8x8xf32> to vector<2x8x8xbf16>
    %32 = vector.shape_cast %22 : vector<16x8xf32> to vector<2x8x8xf32>
    %33 = arith.truncf %32 : vector<2x8x8xf32> to vector<2x8x8xbf16>
    %34 = vector.shape_cast %29 : vector<16x8xf32> to vector<2x8x8xf32>
    %35 = arith.truncf %34 : vector<2x8x8xf32> to vector<2x8x8xbf16>
    "tpu.trace_start"() <{level = 10 : i32, message = "bqd,bkd->bqk"}> : () -> ()
    %cst_33 = arith.constant dense<0.000000e+00> : vector<2x8x8xf32>
    %36 = tpu.matmul %31, %33, %cst_33 {dimension_numbers = #tpu.dot_dimension_numbers<[2], [2], [1], [1], [0, 0, 0, 1, 1, 1], [0], [0]>} : vector<2x8x8xbf16>, vector<2x8x8xbf16>, vector<2x8x8xf32> -> vector<2x8x8xf32>
    "tpu.trace_stop"() : () -> ()
    %37 = vector.broadcast %5 : vector<2x1x8xf32> to vector<2x8x8xf32>
    %38 = arith.addf %36, %37 : vector<2x8x8xf32>
    %cst_34 = arith.constant dense<0xFF800000> : vector<2x8xf32>
    %39 = vector.multi_reduction <maximumf>, %38, %cst_34 [2] : vector<2x8x8xf32> to vector<2x8xf32>
    %40 = vector.shape_cast %39 : vector<2x8xf32> to vector<2x8x1xf32>
    %41 = vector.broadcast %40 : vector<2x8x1xf32> to vector<2x8x8xf32>
    %42 = arith.subf %38, %41 : vector<2x8x8xf32>
    %43 = math.exp %42 : vector<2x8x8xf32>
    %cst_35 = arith.constant dense<0.000000e+00> : vector<2x8xf32>
    %44 = vector.multi_reduction <add>, %43, %cst_35 [2] : vector<2x8x8xf32> to vector<2x8xf32>
    %45 = vector.shape_cast %44 : vector<2x8xf32> to vector<2x8x1xf32>
    %46 = tpu.reciprocal %45 {approx = true} : vector<2x8x1xf32> -> vector<2x8x1xf32>
    %47 = arith.truncf %43 : vector<2x8x8xf32> to vector<2x8x8xbf16>
    "tpu.trace_start"() <{level = 10 : i32, message = "bqk,bkd->bqd"}> : () -> ()
    %cst_36 = arith.constant dense<0.000000e+00> : vector<2x8x8xf32>
    %48 = tpu.matmul %47, %35, %cst_36 {dimension_numbers = #tpu.dot_dimension_numbers<[2], [1], [1], [2], [0, 0, 0, 1, 1, 2], [0], [0]>} : vector<2x8x8xbf16>, vector<2x8x8xbf16>, vector<2x8x8xf32> -> vector<2x8x8xf32>
    "tpu.trace_stop"() : () -> ()
    %49 = vector.broadcast %46 : vector<2x8x1xf32> to vector<2x8x8xf32>
    %50 = arith.mulf %48, %49 : vector<2x8x8xf32>
    %51 = vector.shape_cast %50 : vector<2x8x8xf32> to vector<16x8xf32>
    %52 = arith.truncf %51 : vector<16x8xf32> to vector<16x8xbf16>
    %c0_37 = arith.constant 0 : index
    %c0_38 = arith.constant 0 : index
    %c0_39 = arith.constant 0 : index
    %c0_40 = arith.constant 0 : index
    %53 = vector.load %arg10[%c0_37, %c0_38, %c0_39, %c0_40] : memref<1x4x8x32xbf16, #tpu.memory_space<vmem>>, vector<1x1x8x32xbf16>
    %54 = vector.shape_cast %53 : vector<1x1x8x32xbf16> to vector<8x32xbf16>
    %cst_41 = arith.constant dense<0.000000e+00> : vector<16x32xf32>
    %55 = tpu.matmul %52, %54, %cst_41 {dimension_numbers = #tpu.dot_dimension_numbers<[1], [0], [0], [1], [0, 0, 1, 1], [], []>} : vector<16x8xbf16>, vector<8x32xbf16>, vector<16x32xf32> -> vector<16x32xf32>
    %56 = arith.addf %6, %55 : vector<16x32xf32>
    %c0_42 = arith.constant 0 : index
    %c1 = arith.constant 1 : index
    %c0_43 = arith.constant 0 : index
    %c0_44 = arith.constant 0 : index
    %57 = vector.load %arg4[%c0_42, %c1, %c0_43, %c0_44] : memref<1x4x32x8xbf16, #tpu.memory_space<vmem>>, vector<1x1x32x8xbf16>
    %58 = vector.shape_cast %57 : vector<1x1x32x8xbf16> to vector<32x8xbf16>
    %cst_45 = arith.constant dense<0.000000e+00> : vector<16x8xf32>
    %59 = tpu.matmul %4, %58, %cst_45 {dimension_numbers = #tpu.dot_dimension_numbers<[1], [0], [0], [1], [0, 0, 1, 1], [], []>} : vector<16x32xbf16>, vector<32x8xbf16>, vector<16x8xf32> -> vector<16x8xf32>
    %c0_46 = arith.constant 0 : index
    %c1_47 = arith.constant 1 : index
    %c0_48 = arith.constant 0 : index
    %c0_49 = arith.constant 0 : index
    %60 = vector.load %arg5[%c0_46, %c1_47, %c0_48, %c0_49] : memref<1x4x1x8xf32, #tpu.memory_space<vmem>>, vector<1x1x1x8xf32>
    %61 = vector.shape_cast %60 : vector<1x1x1x8xf32> to vector<1x8xf32>
    %62 = vector.broadcast %61 : vector<1x8xf32> to vector<16x8xf32>
    %63 = arith.addf %59, %62 : vector<16x8xf32>
    %cst_50 = arith.constant 0.353553385 : f32
    %64 = vector.broadcast %cst_50 : f32 to vector<16x8xf32>
    %65 = arith.mulf %63, %64 : vector<16x8xf32>
    %c0_51 = arith.constant 0 : index
    %c1_52 = arith.constant 1 : index
    %c0_53 = arith.constant 0 : index
    %c0_54 = arith.constant 0 : index
    %66 = vector.load %arg6[%c0_51, %c1_52, %c0_53, %c0_54] : memref<1x4x32x8xbf16, #tpu.memory_space<vmem>>, vector<1x1x32x8xbf16>
    %67 = vector.shape_cast %66 : vector<1x1x32x8xbf16> to vector<32x8xbf16>
    %cst_55 = arith.constant dense<0.000000e+00> : vector<16x8xf32>
    %68 = tpu.matmul %4, %67, %cst_55 {dimension_numbers = #tpu.dot_dimension_numbers<[1], [0], [0], [1], [0, 0, 1, 1], [], []>} : vector<16x32xbf16>, vector<32x8xbf16>, vector<16x8xf32> -> vector<16x8xf32>
    %c0_56 = arith.constant 0 : index
    %c1_57 = arith.constant 1 : index
    %c0_58 = arith.constant 0 : index
    %c0_59 = arith.constant 0 : index
    %69 = vector.load %arg7[%c0_56, %c1_57, %c0_58, %c0_59] : memref<1x4x1x8xf32, #tpu.memory_space<vmem>>, vector<1x1x1x8xf32>
    %70 = vector.shape_cast %69 : vector<1x1x1x8xf32> to vector<1x8xf32>
    %71 = vector.broadcast %70 : vector<1x8xf32> to vector<16x8xf32>
    %72 = arith.addf %68, %71 : vector<16x8xf32>
    %c0_60 = arith.constant 0 : index
    %c1_61 = arith.constant 1 : index
    %c0_62 = arith.constant 0 : index
    %c0_63 = arith.constant 0 : index
    %73 = vector.load %arg8[%c0_60, %c1_61, %c0_62, %c0_63] : memref<1x4x32x8xbf16, #tpu.memory_space<vmem>>, vector<1x1x32x8xbf16>
    %74 = vector.shape_cast %73 : vector<1x1x32x8xbf16> to vector<32x8xbf16>
    %cst_64 = arith.constant dense<0.000000e+00> : vector<16x8xf32>
    %75 = tpu.matmul %4, %74, %cst_64 {dimension_numbers = #tpu.dot_dimension_numbers<[1], [0], [0], [1], [0, 0, 1, 1], [], []>} : vector<16x32xbf16>, vector<32x8xbf16>, vector<16x8xf32> -> vector<16x8xf32>
    %c0_65 = arith.constant 0 : index
    %c1_66 = arith.constant 1 : index
    %c0_67 = arith.constant 0 : index
    %c0_68 = arith.constant 0 : index
    %76 = vector.load %arg9[%c0_65, %c1_66, %c0_67, %c0_68] : memref<1x4x1x8xf32, #tpu.memory_space<vmem>>, vector<1x1x1x8xf32>
    %77 = vector.shape_cast %76 : vector<1x1x1x8xf32> to vector<1x8xf32>
    %78 = vector.broadcast %77 : vector<1x8xf32> to vector<16x8xf32>
    %79 = arith.addf %75, %78 : vector<16x8xf32>
    %80 = vector.shape_cast %65 : vector<16x8xf32> to vector<2x8x8xf32>
    %81 = arith.truncf %80 : vector<2x8x8xf32> to vector<2x8x8xbf16>
    %82 = vector.shape_cast %72 : vector<16x8xf32> to vector<2x8x8xf32>
    %83 = arith.truncf %82 : vector<2x8x8xf32> to vector<2x8x8xbf16>
    %84 = vector.shape_cast %79 : vector<16x8xf32> to vector<2x8x8xf32>
    %85 = arith.truncf %84 : vector<2x8x8xf32> to vector<2x8x8xbf16>
    "tpu.trace_start"() <{level = 10 : i32, message = "bqd,bkd->bqk"}> : () -> ()
    %cst_69 = arith.constant dense<0.000000e+00> : vector<2x8x8xf32>
    %86 = tpu.matmul %81, %83, %cst_69 {dimension_numbers = #tpu.dot_dimension_numbers<[2], [2], [1], [1], [0, 0, 0, 1, 1, 1], [0], [0]>} : vector<2x8x8xbf16>, vector<2x8x8xbf16>, vector<2x8x8xf32> -> vector<2x8x8xf32>
    "tpu.trace_stop"() : () -> ()
    %87 = vector.broadcast %5 : vector<2x1x8xf32> to vector<2x8x8xf32>
    %88 = arith.addf %86, %87 : vector<2x8x8xf32>
    %cst_70 = arith.constant dense<0xFF800000> : vector<2x8xf32>
    %89 = vector.multi_reduction <maximumf>, %88, %cst_70 [2] : vector<2x8x8xf32> to vector<2x8xf32>
    %90 = vector.shape_cast %89 : vector<2x8xf32> to vector<2x8x1xf32>
    %91 = vector.broadcast %90 : vector<2x8x1xf32> to vector<2x8x8xf32>
    %92 = arith.subf %88, %91 : vector<2x8x8xf32>
    %93 = math.exp %92 : vector<2x8x8xf32>
    %cst_71 = arith.constant dense<0.000000e+00> : vector<2x8xf32>
    %94 = vector.multi_reduction <add>, %93, %cst_71 [2] : vector<2x8x8xf32> to vector<2x8xf32>
    %95 = vector.shape_cast %94 : vector<2x8xf32> to vector<2x8x1xf32>
    %96 = tpu.reciprocal %95 {approx = true} : vector<2x8x1xf32> -> vector<2x8x1xf32>
    %97 = arith.truncf %93 : vector<2x8x8xf32> to vector<2x8x8xbf16>
    "tpu.trace_start"() <{level = 10 : i32, message = "bqk,bkd->bqd"}> : () -> ()
    %cst_72 = arith.constant dense<0.000000e+00> : vector<2x8x8xf32>
    %98 = tpu.matmul %97, %85, %cst_72 {dimension_numbers = #tpu.dot_dimension_numbers<[2], [1], [1], [2], [0, 0, 0, 1, 1, 2], [0], [0]>} : vector<2x8x8xbf16>, vector<2x8x8xbf16>, vector<2x8x8xf32> -> vector<2x8x8xf32>
    "tpu.trace_stop"() : () -> ()
    %99 = vector.broadcast %96 : vector<2x8x1xf32> to vector<2x8x8xf32>
    %100 = arith.mulf %98, %99 : vector<2x8x8xf32>
    %101 = vector.shape_cast %100 : vector<2x8x8xf32> to vector<16x8xf32>
    %102 = arith.truncf %101 : vector<16x8xf32> to vector<16x8xbf16>
    %c0_73 = arith.constant 0 : index
    %c1_74 = arith.constant 1 : index
    %c0_75 = arith.constant 0 : index
    %c0_76 = arith.constant 0 : index
    %103 = vector.load %arg10[%c0_73, %c1_74, %c0_75, %c0_76] : memref<1x4x8x32xbf16, #tpu.memory_space<vmem>>, vector<1x1x8x32xbf16>
    %104 = vector.shape_cast %103 : vector<1x1x8x32xbf16> to vector<8x32xbf16>
    %cst_77 = arith.constant dense<0.000000e+00> : vector<16x32xf32>
    %105 = tpu.matmul %102, %104, %cst_77 {dimension_numbers = #tpu.dot_dimension_numbers<[1], [0], [0], [1], [0, 0, 1, 1], [], []>} : vector<16x8xbf16>, vector<8x32xbf16>, vector<16x32xf32> -> vector<16x32xf32>
    %106 = arith.addf %56, %105 : vector<16x32xf32>
    %c0_78 = arith.constant 0 : index
    %c2 = arith.constant 2 : index
    %c0_79 = arith.constant 0 : index
    %c0_80 = arith.constant 0 : index
    %107 = vector.load %arg4[%c0_78, %c2, %c0_79, %c0_80] : memref<1x4x32x8xbf16, #tpu.memory_space<vmem>>, vector<1x1x32x8xbf16>
    %108 = vector.shape_cast %107 : vector<1x1x32x8xbf16> to vector<32x8xbf16>
    %cst_81 = arith.constant dense<0.000000e+00> : vector<16x8xf32>
    %109 = tpu.matmul %4, %108, %cst_81 {dimension_numbers = #tpu.dot_dimension_numbers<[1], [0], [0], [1], [0, 0, 1, 1], [], []>} : vector<16x32xbf16>, vector<32x8xbf16>, vector<16x8xf32> -> vector<16x8xf32>
    %c0_82 = arith.constant 0 : index
    %c2_83 = arith.constant 2 : index
    %c0_84 = arith.constant 0 : index
    %c0_85 = arith.constant 0 : index
    %110 = vector.load %arg5[%c0_82, %c2_83, %c0_84, %c0_85] : memref<1x4x1x8xf32, #tpu.memory_space<vmem>>, vector<1x1x1x8xf32>
    %111 = vector.shape_cast %110 : vector<1x1x1x8xf32> to vector<1x8xf32>
    %112 = vector.broadcast %111 : vector<1x8xf32> to vector<16x8xf32>
    %113 = arith.addf %109, %112 : vector<16x8xf32>
    %cst_86 = arith.constant 0.353553385 : f32
    %114 = vector.broadcast %cst_86 : f32 to vector<16x8xf32>
    %115 = arith.mulf %113, %114 : vector<16x8xf32>
    %c0_87 = arith.constant 0 : index
    %c2_88 = arith.constant 2 : index
    %c0_89 = arith.constant 0 : index
    %c0_90 = arith.constant 0 : index
    %116 = vector.load %arg6[%c0_87, %c2_88, %c0_89, %c0_90] : memref<1x4x32x8xbf16, #tpu.memory_space<vmem>>, vector<1x1x32x8xbf16>
    %117 = vector.shape_cast %116 : vector<1x1x32x8xbf16> to vector<32x8xbf16>
    %cst_91 = arith.constant dense<0.000000e+00> : vector<16x8xf32>
    %118 = tpu.matmul %4, %117, %cst_91 {dimension_numbers = #tpu.dot_dimension_numbers<[1], [0], [0], [1], [0, 0, 1, 1], [], []>} : vector<16x32xbf16>, vector<32x8xbf16>, vector<16x8xf32> -> vector<16x8xf32>
    %c0_92 = arith.constant 0 : index
    %c2_93 = arith.constant 2 : index
    %c0_94 = arith.constant 0 : index
    %c0_95 = arith.constant 0 : index
    %119 = vector.load %arg7[%c0_92, %c2_93, %c0_94, %c0_95] : memref<1x4x1x8xf32, #tpu.memory_space<vmem>>, vector<1x1x1x8xf32>
    %120 = vector.shape_cast %119 : vector<1x1x1x8xf32> to vector<1x8xf32>
    %121 = vector.broadcast %120 : vector<1x8xf32> to vector<16x8xf32>
    %122 = arith.addf %118, %121 : vector<16x8xf32>
    %c0_96 = arith.constant 0 : index
    %c2_97 = arith.constant 2 : index
    %c0_98 = arith.constant 0 : index
    %c0_99 = arith.constant 0 : index
    %123 = vector.load %arg8[%c0_96, %c2_97, %c0_98, %c0_99] : memref<1x4x32x8xbf16, #tpu.memory_space<vmem>>, vector<1x1x32x8xbf16>
    %124 = vector.shape_cast %123 : vector<1x1x32x8xbf16> to vector<32x8xbf16>
    %cst_100 = arith.constant dense<0.000000e+00> : vector<16x8xf32>
    %125 = tpu.matmul %4, %124, %cst_100 {dimension_numbers = #tpu.dot_dimension_numbers<[1], [0], [0], [1], [0, 0, 1, 1], [], []>} : vector<16x32xbf16>, vector<32x8xbf16>, vector<16x8xf32> -> vector<16x8xf32>
    %c0_101 = arith.constant 0 : index
    %c2_102 = arith.constant 2 : index
    %c0_103 = arith.constant 0 : index
    %c0_104 = arith.constant 0 : index
    %126 = vector.load %arg9[%c0_101, %c2_102, %c0_103, %c0_104] : memref<1x4x1x8xf32, #tpu.memory_space<vmem>>, vector<1x1x1x8xf32>
    %127 = vector.shape_cast %126 : vector<1x1x1x8xf32> to vector<1x8xf32>
    %128 = vector.broadcast %127 : vector<1x8xf32> to vector<16x8xf32>
    %129 = arith.addf %125, %128 : vector<16x8xf32>
    %130 = vector.shape_cast %115 : vector<16x8xf32> to vector<2x8x8xf32>
    %131 = arith.truncf %130 : vector<2x8x8xf32> to vector<2x8x8xbf16>
    %132 = vector.shape_cast %122 : vector<16x8xf32> to vector<2x8x8xf32>
    %133 = arith.truncf %132 : vector<2x8x8xf32> to vector<2x8x8xbf16>
    %134 = vector.shape_cast %129 : vector<16x8xf32> to vector<2x8x8xf32>
    %135 = arith.truncf %134 : vector<2x8x8xf32> to vector<2x8x8xbf16>
    "tpu.trace_start"() <{level = 10 : i32, message = "bqd,bkd->bqk"}> : () -> ()
    %cst_105 = arith.constant dense<0.000000e+00> : vector<2x8x8xf32>
    %136 = tpu.matmul %131, %133, %cst_105 {dimension_numbers = #tpu.dot_dimension_numbers<[2], [2], [1], [1], [0, 0, 0, 1, 1, 1], [0], [0]>} : vector<2x8x8xbf16>, vector<2x8x8xbf16>, vector<2x8x8xf32> -> vector<2x8x8xf32>
    "tpu.trace_stop"() : () -> ()
    %137 = vector.broadcast %5 : vector<2x1x8xf32> to vector<2x8x8xf32>
    %138 = arith.addf %136, %137 : vector<2x8x8xf32>
    %cst_106 = arith.constant dense<0xFF800000> : vector<2x8xf32>
    %139 = vector.multi_reduction <maximumf>, %138, %cst_106 [2] : vector<2x8x8xf32> to vector<2x8xf32>
    %140 = vector.shape_cast %139 : vector<2x8xf32> to vector<2x8x1xf32>
    %141 = vector.broadcast %140 : vector<2x8x1xf32> to vector<2x8x8xf32>
    %142 = arith.subf %138, %141 : vector<2x8x8xf32>
    %143 = math.exp %142 : vector<2x8x8xf32>
    %cst_107 = arith.constant dense<0.000000e+00> : vector<2x8xf32>
    %144 = vector.multi_reduction <add>, %143, %cst_107 [2] : vector<2x8x8xf32> to vector<2x8xf32>
    %145 = vector.shape_cast %144 : vector<2x8xf32> to vector<2x8x1xf32>
    %146 = tpu.reciprocal %145 {approx = true} : vector<2x8x1xf32> -> vector<2x8x1xf32>
    %147 = arith.truncf %143 : vector<2x8x8xf32> to vector<2x8x8xbf16>
    "tpu.trace_start"() <{level = 10 : i32, message = "bqk,bkd->bqd"}> : () -> ()
    %cst_108 = arith.constant dense<0.000000e+00> : vector<2x8x8xf32>
    %148 = tpu.matmul %147, %135, %cst_108 {dimension_numbers = #tpu.dot_dimension_numbers<[2], [1], [1], [2], [0, 0, 0, 1, 1, 2], [0], [0]>} : vector<2x8x8xbf16>, vector<2x8x8xbf16>, vector<2x8x8xf32> -> vector<2x8x8xf32>
    "tpu.trace_stop"() : () -> ()
    %149 = vector.broadcast %146 : vector<2x8x1xf32> to vector<2x8x8xf32>
    %150 = arith.mulf %148, %149 : vector<2x8x8xf32>
    %151 = vector.shape_cast %150 : vector<2x8x8xf32> to vector<16x8xf32>
    %152 = arith.truncf %151 : vector<16x8xf32> to vector<16x8xbf16>
    %c0_109 = arith.constant 0 : index
    %c2_110 = arith.constant 2 : index
    %c0_111 = arith.constant 0 : index
    %c0_112 = arith.constant 0 : index
    %153 = vector.load %arg10[%c0_109, %c2_110, %c0_111, %c0_112] : memref<1x4x8x32xbf16, #tpu.memory_space<vmem>>, vector<1x1x8x32xbf16>
    %154 = vector.shape_cast %153 : vector<1x1x8x32xbf16> to vector<8x32xbf16>
    %cst_113 = arith.constant dense<0.000000e+00> : vector<16x32xf32>
    %155 = tpu.matmul %152, %154, %cst_113 {dimension_numbers = #tpu.dot_dimension_numbers<[1], [0], [0], [1], [0, 0, 1, 1], [], []>} : vector<16x8xbf16>, vector<8x32xbf16>, vector<16x32xf32> -> vector<16x32xf32>
    %156 = arith.addf %106, %155 : vector<16x32xf32>
    %c0_114 = arith.constant 0 : index
    %c3 = arith.constant 3 : index
    %c0_115 = arith.constant 0 : index
    %c0_116 = arith.constant 0 : index
    %157 = vector.load %arg4[%c0_114, %c3, %c0_115, %c0_116] : memref<1x4x32x8xbf16, #tpu.memory_space<vmem>>, vector<1x1x32x8xbf16>
    %158 = vector.shape_cast %157 : vector<1x1x32x8xbf16> to vector<32x8xbf16>
    %cst_117 = arith.constant dense<0.000000e+00> : vector<16x8xf32>
    %159 = tpu.matmul %4, %158, %cst_117 {dimension_numbers = #tpu.dot_dimension_numbers<[1], [0], [0], [1], [0, 0, 1, 1], [], []>} : vector<16x32xbf16>, vector<32x8xbf16>, vector<16x8xf32> -> vector<16x8xf32>
    %c0_118 = arith.constant 0 : index
    %c3_119 = arith.constant 3 : index
    %c0_120 = arith.constant 0 : index
    %c0_121 = arith.constant 0 : index
    %160 = vector.load %arg5[%c0_118, %c3_119, %c0_120, %c0_121] : memref<1x4x1x8xf32, #tpu.memory_space<vmem>>, vector<1x1x1x8xf32>
    %161 = vector.shape_cast %160 : vector<1x1x1x8xf32> to vector<1x8xf32>
    %162 = vector.broadcast %161 : vector<1x8xf32> to vector<16x8xf32>
    %163 = arith.addf %159, %162 : vector<16x8xf32>
    %cst_122 = arith.constant 0.353553385 : f32
    %164 = vector.broadcast %cst_122 : f32 to vector<16x8xf32>
    %165 = arith.mulf %163, %164 : vector<16x8xf32>
    %c0_123 = arith.constant 0 : index
    %c3_124 = arith.constant 3 : index
    %c0_125 = arith.constant 0 : index
    %c0_126 = arith.constant 0 : index
    %166 = vector.load %arg6[%c0_123, %c3_124, %c0_125, %c0_126] : memref<1x4x32x8xbf16, #tpu.memory_space<vmem>>, vector<1x1x32x8xbf16>
    %167 = vector.shape_cast %166 : vector<1x1x32x8xbf16> to vector<32x8xbf16>
    %cst_127 = arith.constant dense<0.000000e+00> : vector<16x8xf32>
    %168 = tpu.matmul %4, %167, %cst_127 {dimension_numbers = #tpu.dot_dimension_numbers<[1], [0], [0], [1], [0, 0, 1, 1], [], []>} : vector<16x32xbf16>, vector<32x8xbf16>, vector<16x8xf32> -> vector<16x8xf32>
    %c0_128 = arith.constant 0 : index
    %c3_129 = arith.constant 3 : index
    %c0_130 = arith.constant 0 : index
    %c0_131 = arith.constant 0 : index
    %169 = vector.load %arg7[%c0_128, %c3_129, %c0_130, %c0_131] : memref<1x4x1x8xf32, #tpu.memory_space<vmem>>, vector<1x1x1x8xf32>
    %170 = vector.shape_cast %169 : vector<1x1x1x8xf32> to vector<1x8xf32>
    %171 = vector.broadcast %170 : vector<1x8xf32> to vector<16x8xf32>
    %172 = arith.addf %168, %171 : vector<16x8xf32>
    %c0_132 = arith.constant 0 : index
    %c3_133 = arith.constant 3 : index
    %c0_134 = arith.constant 0 : index
    %c0_135 = arith.constant 0 : index
    %173 = vector.load %arg8[%c0_132, %c3_133, %c0_134, %c0_135] : memref<1x4x32x8xbf16, #tpu.memory_space<vmem>>, vector<1x1x32x8xbf16>
    %174 = vector.shape_cast %173 : vector<1x1x32x8xbf16> to vector<32x8xbf16>
    %cst_136 = arith.constant dense<0.000000e+00> : vector<16x8xf32>
    %175 = tpu.matmul %4, %174, %cst_136 {dimension_numbers = #tpu.dot_dimension_numbers<[1], [0], [0], [1], [0, 0, 1, 1], [], []>} : vector<16x32xbf16>, vector<32x8xbf16>, vector<16x8xf32> -> vector<16x8xf32>
    %c0_137 = arith.constant 0 : index
    %c3_138 = arith.constant 3 : index
    %c0_139 = arith.constant 0 : index
    %c0_140 = arith.constant 0 : index
    %176 = vector.load %arg9[%c0_137, %c3_138, %c0_139, %c0_140] : memref<1x4x1x8xf32, #tpu.memory_space<vmem>>, vector<1x1x1x8xf32>
    %177 = vector.shape_cast %176 : vector<1x1x1x8xf32> to vector<1x8xf32>
    %178 = vector.broadcast %177 : vector<1x8xf32> to vector<16x8xf32>
    %179 = arith.addf %175, %178 : vector<16x8xf32>
    %180 = vector.shape_cast %165 : vector<16x8xf32> to vector<2x8x8xf32>
    %181 = arith.truncf %180 : vector<2x8x8xf32> to vector<2x8x8xbf16>
    %182 = vector.shape_cast %172 : vector<16x8xf32> to vector<2x8x8xf32>
    %183 = arith.truncf %182 : vector<2x8x8xf32> to vector<2x8x8xbf16>
    %184 = vector.shape_cast %179 : vector<16x8xf32> to vector<2x8x8xf32>
    %185 = arith.truncf %184 : vector<2x8x8xf32> to vector<2x8x8xbf16>
    "tpu.trace_start"() <{level = 10 : i32, message = "bqd,bkd->bqk"}> : () -> ()
    %cst_141 = arith.constant dense<0.000000e+00> : vector<2x8x8xf32>
    %186 = tpu.matmul %181, %183, %cst_141 {dimension_numbers = #tpu.dot_dimension_numbers<[2], [2], [1], [1], [0, 0, 0, 1, 1, 1], [0], [0]>} : vector<2x8x8xbf16>, vector<2x8x8xbf16>, vector<2x8x8xf32> -> vector<2x8x8xf32>
    "tpu.trace_stop"() : () -> ()
    %187 = vector.broadcast %5 : vector<2x1x8xf32> to vector<2x8x8xf32>
    %188 = arith.addf %186, %187 : vector<2x8x8xf32>
    %cst_142 = arith.constant dense<0xFF800000> : vector<2x8xf32>
    %189 = vector.multi_reduction <maximumf>, %188, %cst_142 [2] : vector<2x8x8xf32> to vector<2x8xf32>
    %190 = vector.shape_cast %189 : vector<2x8xf32> to vector<2x8x1xf32>
    %191 = vector.broadcast %190 : vector<2x8x1xf32> to vector<2x8x8xf32>
    %192 = arith.subf %188, %191 : vector<2x8x8xf32>
    %193 = math.exp %192 : vector<2x8x8xf32>
    %cst_143 = arith.constant dense<0.000000e+00> : vector<2x8xf32>
    %194 = vector.multi_reduction <add>, %193, %cst_143 [2] : vector<2x8x8xf32> to vector<2x8xf32>
    %195 = vector.shape_cast %194 : vector<2x8xf32> to vector<2x8x1xf32>
    %196 = tpu.reciprocal %195 {approx = true} : vector<2x8x1xf32> -> vector<2x8x1xf32>
    %197 = arith.truncf %193 : vector<2x8x8xf32> to vector<2x8x8xbf16>
    "tpu.trace_start"() <{level = 10 : i32, message = "bqk,bkd->bqd"}> : () -> ()
    %cst_144 = arith.constant dense<0.000000e+00> : vector<2x8x8xf32>
    %198 = tpu.matmul %197, %185, %cst_144 {dimension_numbers = #tpu.dot_dimension_numbers<[2], [1], [1], [2], [0, 0, 0, 1, 1, 2], [0], [0]>} : vector<2x8x8xbf16>, vector<2x8x8xbf16>, vector<2x8x8xf32> -> vector<2x8x8xf32>
    "tpu.trace_stop"() : () -> ()
    %199 = vector.broadcast %196 : vector<2x8x1xf32> to vector<2x8x8xf32>
    %200 = arith.mulf %198, %199 : vector<2x8x8xf32>
    %201 = vector.shape_cast %200 : vector<2x8x8xf32> to vector<16x8xf32>
    %202 = arith.truncf %201 : vector<16x8xf32> to vector<16x8xbf16>
    %c0_145 = arith.constant 0 : index
    %c3_146 = arith.constant 3 : index
    %c0_147 = arith.constant 0 : index
    %c0_148 = arith.constant 0 : index
    %203 = vector.load %arg10[%c0_145, %c3_146, %c0_147, %c0_148] : memref<1x4x8x32xbf16, #tpu.memory_space<vmem>>, vector<1x1x8x32xbf16>
    %204 = vector.shape_cast %203 : vector<1x1x8x32xbf16> to vector<8x32xbf16>
    %cst_149 = arith.constant dense<0.000000e+00> : vector<16x32xf32>
    %205 = tpu.matmul %202, %204, %cst_149 {dimension_numbers = #tpu.dot_dimension_numbers<[1], [0], [0], [1], [0, 0, 1, 1], [], []>} : vector<16x8xbf16>, vector<8x32xbf16>, vector<16x32xf32> -> vector<16x32xf32>
    %206 = arith.addf %156, %205 : vector<16x32xf32>
    %c0_150 = arith.constant 0 : index
    %c0_151 = arith.constant 0 : index
    %c0_152 = arith.constant 0 : index
    %207 = vector.load %arg11[%c0_150, %c0_151, %c0_152] : memref<1x1x32xf32, #tpu.memory_space<vmem>>, vector<1x1x32xf32>
    %208 = vector.shape_cast %207 : vector<1x1x32xf32> to vector<1x32xf32>
    %209 = vector.broadcast %208 : vector<1x32xf32> to vector<16x32xf32>
    %210 = arith.addf %206, %209 : vector<16x32xf32>
    %211 = arith.addf %3, %210 : vector<16x32xf32>
    %cst_153 = arith.constant dense<0.000000e+00> : vector<16xf32>
    %212 = vector.multi_reduction <add>, %211, %cst_153 [1] : vector<16x32xf32> to vector<16xf32>
    %213 = vector.shape_cast %212 : vector<16xf32> to vector<16x1xf32>
    %cst_154 = arith.constant 3.200000e+01 : f32
    %214 = vector.broadcast %cst_154 : f32 to vector<16x1xf32>
    %215 = arith.divf %213, %214 : vector<16x1xf32>
    %216 = vector.broadcast %215 : vector<16x1xf32> to vector<16x32xf32>
    %217 = arith.subf %211, %216 : vector<16x32xf32>
    %218 = arith.mulf %217, %217 : vector<16x32xf32>
    %cst_155 = arith.constant dense<0.000000e+00> : vector<16xf32>
    %219 = vector.multi_reduction <add>, %218, %cst_155 [1] : vector<16x32xf32> to vector<16xf32>
    %220 = vector.shape_cast %219 : vector<16xf32> to vector<16x1xf32>
    %cst_156 = arith.constant 3.200000e+01 : f32
    %221 = vector.broadcast %cst_156 : f32 to vector<16x1xf32>
    %222 = arith.divf %220, %221 : vector<16x1xf32>
    %223 = vector.broadcast %215 : vector<16x1xf32> to vector<16x32xf32>
    %224 = arith.subf %211, %223 : vector<16x32xf32>
    %cst_157 = arith.constant 9.99999974E-6 : f32
    %225 = vector.broadcast %cst_157 : f32 to vector<16x1xf32>
    %226 = arith.addf %222, %225 : vector<16x1xf32>
    %227 = math.rsqrt %226 : vector<16x1xf32>
    %228 = vector.broadcast %227 : vector<16x1xf32> to vector<16x32xf32>
    %229 = arith.mulf %224, %228 : vector<16x32xf32>
    %c0_158 = arith.constant 0 : index
    %c0_159 = arith.constant 0 : index
    %c0_160 = arith.constant 0 : index
    %230 = vector.load %arg12[%c0_158, %c0_159, %c0_160] : memref<1x1x32xf32, #tpu.memory_space<vmem>>, vector<1x1x32xf32>
    %231 = vector.shape_cast %230 : vector<1x1x32xf32> to vector<1x32xf32>
    %232 = vector.broadcast %231 : vector<1x32xf32> to vector<16x32xf32>
    %233 = arith.mulf %229, %232 : vector<16x32xf32>
    %c0_161 = arith.constant 0 : index
    %c0_162 = arith.constant 0 : index
    %c0_163 = arith.constant 0 : index
    %234 = vector.load %arg13[%c0_161, %c0_162, %c0_163] : memref<1x1x32xf32, #tpu.memory_space<vmem>>, vector<1x1x32xf32>
    %235 = vector.shape_cast %234 : vector<1x1x32xf32> to vector<1x32xf32>
    %236 = vector.broadcast %235 : vector<1x32xf32> to vector<16x32xf32>
    %237 = arith.addf %233, %236 : vector<16x32xf32>
    %238 = arith.truncf %237 : vector<16x32xf32> to vector<16x32xbf16>
    %c0_164 = arith.constant 0 : index
    %c0_165 = arith.constant 0 : index
    %c0_166 = arith.constant 0 : index
    %239 = vector.load %arg14[%c0_164, %c0_165, %c0_166] : memref<1x32x64xbf16, #tpu.memory_space<vmem>>, vector<1x32x64xbf16>
    %240 = vector.shape_cast %239 : vector<1x32x64xbf16> to vector<32x64xbf16>
    %cst_167 = arith.constant dense<0.000000e+00> : vector<16x64xf32>
    %241 = tpu.matmul %238, %240, %cst_167 {dimension_numbers = #tpu.dot_dimension_numbers<[1], [0], [0], [1], [0, 0, 1, 1], [], []>} : vector<16x32xbf16>, vector<32x64xbf16>, vector<16x64xf32> -> vector<16x64xf32>
    %c0_168 = arith.constant 0 : index
    %c0_169 = arith.constant 0 : index
    %c0_170 = arith.constant 0 : index
    %242 = vector.load %arg15[%c0_168, %c0_169, %c0_170] : memref<1x1x64xf32, #tpu.memory_space<vmem>>, vector<1x1x64xf32>
    %243 = vector.shape_cast %242 : vector<1x1x64xf32> to vector<1x64xf32>
    %244 = vector.broadcast %243 : vector<1x64xf32> to vector<16x64xf32>
    %245 = arith.addf %241, %244 : vector<16x64xf32>
    %cst_171 = arith.constant 0.000000e+00 : f32
    %246 = vector.broadcast %cst_171 : f32 to vector<16x64xf32>
    %247 = arith.maximumf %245, %246 : vector<16x64xf32>
    %248 = arith.truncf %247 : vector<16x64xf32> to vector<16x64xbf16>
    %c0_172 = arith.constant 0 : index
    %c0_173 = arith.constant 0 : index
    %c0_174 = arith.constant 0 : index
    %249 = vector.load %arg16[%c0_172, %c0_173, %c0_174] : memref<1x64x32xbf16, #tpu.memory_space<vmem>>, vector<1x64x32xbf16>
    %250 = vector.shape_cast %249 : vector<1x64x32xbf16> to vector<64x32xbf16>
    %cst_175 = arith.constant dense<0.000000e+00> : vector<16x32xf32>
    %251 = tpu.matmul %248, %250, %cst_175 {dimension_numbers = #tpu.dot_dimension_numbers<[1], [0], [0], [1], [0, 0, 1, 1], [], []>} : vector<16x64xbf16>, vector<64x32xbf16>, vector<16x32xf32> -> vector<16x32xf32>
    %c0_176 = arith.constant 0 : index
    %c0_177 = arith.constant 0 : index
    %c0_178 = arith.constant 0 : index
    %252 = vector.load %arg17[%c0_176, %c0_177, %c0_178] : memref<1x1x32xf32, #tpu.memory_space<vmem>>, vector<1x1x32xf32>
    %253 = vector.shape_cast %252 : vector<1x1x32xf32> to vector<1x32xf32>
    %254 = vector.broadcast %253 : vector<1x32xf32> to vector<16x32xf32>
    %255 = arith.addf %251, %254 : vector<16x32xf32>
    %256 = arith.addf %237, %255 : vector<16x32xf32>
    %cst_179 = arith.constant dense<0.000000e+00> : vector<16xf32>
    %257 = vector.multi_reduction <add>, %256, %cst_179 [1] : vector<16x32xf32> to vector<16xf32>
    %258 = vector.shape_cast %257 : vector<16xf32> to vector<16x1xf32>
    %cst_180 = arith.constant 3.200000e+01 : f32
    %259 = vector.broadcast %cst_180 : f32 to vector<16x1xf32>
    %260 = arith.divf %258, %259 : vector<16x1xf32>
    %261 = vector.broadcast %260 : vector<16x1xf32> to vector<16x32xf32>
    %262 = arith.subf %256, %261 : vector<16x32xf32>
    %263 = arith.mulf %262, %262 : vector<16x32xf32>
    %cst_181 = arith.constant dense<0.000000e+00> : vector<16xf32>
    %264 = vector.multi_reduction <add>, %263, %cst_181 [1] : vector<16x32xf32> to vector<16xf32>
    %265 = vector.shape_cast %264 : vector<16xf32> to vector<16x1xf32>
    %cst_182 = arith.constant 3.200000e+01 : f32
    %266 = vector.broadcast %cst_182 : f32 to vector<16x1xf32>
    %267 = arith.divf %265, %266 : vector<16x1xf32>
    %268 = vector.broadcast %260 : vector<16x1xf32> to vector<16x32xf32>
    %269 = arith.subf %256, %268 : vector<16x32xf32>
    %cst_183 = arith.constant 9.99999974E-6 : f32
    %270 = vector.broadcast %cst_183 : f32 to vector<16x1xf32>
    %271 = arith.addf %267, %270 : vector<16x1xf32>
    %272 = math.rsqrt %271 : vector<16x1xf32>
    %273 = vector.broadcast %272 : vector<16x1xf32> to vector<16x32xf32>
    %274 = arith.mulf %269, %273 : vector<16x32xf32>
    %c0_184 = arith.constant 0 : index
    %c0_185 = arith.constant 0 : index
    %c0_186 = arith.constant 0 : index
    %275 = vector.load %arg18[%c0_184, %c0_185, %c0_186] : memref<1x1x32xf32, #tpu.memory_space<vmem>>, vector<1x1x32xf32>
    %276 = vector.shape_cast %275 : vector<1x1x32xf32> to vector<1x32xf32>
    %277 = vector.broadcast %276 : vector<1x32xf32> to vector<16x32xf32>
    %278 = arith.mulf %274, %277 : vector<16x32xf32>
    %c0_187 = arith.constant 0 : index
    %c0_188 = arith.constant 0 : index
    %c0_189 = arith.constant 0 : index
    %279 = vector.load %arg19[%c0_187, %c0_188, %c0_189] : memref<1x1x32xf32, #tpu.memory_space<vmem>>, vector<1x1x32xf32>
    %280 = vector.shape_cast %279 : vector<1x1x32xf32> to vector<1x32xf32>
    %281 = vector.broadcast %280 : vector<1x32xf32> to vector<16x32xf32>
    %282 = arith.addf %278, %281 : vector<16x32xf32>
    %c0_190 = arith.constant 0 : index
    %c0_191 = arith.constant 0 : index
    %283 = vector.load %arg20[%c0_190, %c0_191] : memref<16x32xf32, #tpu.memory_space<vmem>>, vector<16x32xf32>
    tpu.vector_store %arg20[%c0_190, %c0_191], %282 {strides = array<i32>} : memref<16x32xf32, #tpu.memory_space<vmem>>, vector<16x32xf32>,
    return
  }
  func.func @transform_0(%arg0: i32, %arg1: i32) -> (i32, i32) {
    %c0_i32 = arith.constant 0 : i32
    %c0_i32_0 = arith.constant 0 : i32
    return %arg0, %c0_i32 : i32, i32
  }
  func.func @transform_1(%arg0: i32, %arg1: i32) -> (i32, i32, i32) {
    %c0_i32 = arith.constant 0 : i32
    %c0_i32_0 = arith.constant 0 : i32
    %c0_i32_1 = arith.constant 0 : i32
    return %arg0, %c0_i32, %c0_i32_0 : i32, i32, i32
  }
  func.func @transform_2(%arg0: i32, %arg1: i32) -> (i32, i32, i32, i32) {
    %c0_i32 = arith.constant 0 : i32
    %c0_i32_0 = arith.constant 0 : i32
    %c0_i32_1 = arith.constant 0 : i32
    %c0_i32_2 = arith.constant 0 : i32
    return %arg1, %c0_i32, %c0_i32_0, %c0_i32_1 : i32, i32, i32, i32
  }
  func.func @transform_3(%arg0: i32, %arg1: i32) -> (i32, i32, i32, i32) {
    %c0_i32 = arith.constant 0 : i32
    %c0_i32_0 = arith.constant 0 : i32
    %c0_i32_1 = arith.constant 0 : i32
    %c0_i32_2 = arith.constant 0 : i32
    return %arg1, %c0_i32, %c0_i32_0, %c0_i32_1 : i32, i32, i32, i32
  }
  func.func @transform_4(%arg0: i32, %arg1: i32) -> (i32, i32, i32, i32) {
    %c0_i32 = arith.constant 0 : i32
    %c0_i32_0 = arith.constant 0 : i32
    %c0_i32_1 = arith.constant 0 : i32
    %c0_i32_2 = arith.constant 0 : i32
    return %arg1, %c0_i32, %c0_i32_0, %c0_i32_1 : i32, i32, i32, i32
  }
  func.func @transform_5(%arg0: i32, %arg1: i32) -> (i32, i32, i32, i32) {
    %c0_i32 = arith.constant 0 : i32
    %c0_i32_0 = arith.constant 0 : i32
    %c0_i32_1 = arith.constant 0 : i32
    %c0_i32_2 = arith.constant 0 : i32
    return %arg1, %c0_i32, %c0_i32_0, %c0_i32_1 : i32, i32, i32, i32
  }
  func.func @transform_6(%arg0: i32, %arg1: i32) -> (i32, i32, i32, i32) {
    %c0_i32 = arith.constant 0 : i32
    %c0_i32_0 = arith.constant 0 : i32
    %c0_i32_1 = arith.constant 0 : i32
    %c0_i32_2 = arith.constant 0 : i32
    return %arg1, %c0_i32, %c0_i32_0, %c0_i32_1 : i32, i32, i32, i32
  }
  func.func @transform_7(%arg0: i32, %arg1: i32) -> (i32, i32, i32, i32) {
    %c0_i32 = arith.constant 0 : i32
    %c0_i32_0 = arith.constant 0 : i32
    %c0_i32_1 = arith.constant 0 : i32
    %c0_i32_2 = arith.constant 0 : i32
    return %arg1, %c0_i32, %c0_i32_0, %c0_i32_1 : i32, i32, i32, i32
  }
  func.func @transform_8(%arg0: i32, %arg1: i32) -> (i32, i32, i32, i32) {
    %c0_i32 = arith.constant 0 : i32
    %c0_i32_0 = arith.constant 0 : i32
    %c0_i32_1 = arith.constant 0 : i32
    %c0_i32_2 = arith.constant 0 : i32
    return %arg1, %c0_i32, %c0_i32_0, %c0_i32_1 : i32, i32, i32, i32
  }
  func.func @transform_9(%arg0: i32, %arg1: i32) -> (i32, i32, i32) {
    %c0_i32 = arith.constant 0 : i32
    %c0_i32_0 = arith.constant 0 : i32
    %c0_i32_1 = arith.constant 0 : i32
    return %arg1, %c0_i32, %c0_i32_0 : i32, i32, i32
  }
  func.func @transform_10(%arg0: i32, %arg1: i32) -> (i32, i32, i32) {
    %c0_i32 = arith.constant 0 : i32
    %c0_i32_0 = arith.constant 0 : i32
    %c0_i32_1 = arith.constant 0 : i32
    return %arg1, %c0_i32, %c0_i32_0 : i32, i32, i32
  }
  func.func @transform_11(%arg0: i32, %arg1: i32) -> (i32, i32, i32) {
    %c0_i32 = arith.constant 0 : i32
    %c0_i32_0 = arith.constant 0 : i32
    %c0_i32_1 = arith.constant 0 : i32
    return %arg1, %c0_i32, %c0_i32_0 : i32, i32, i32
  }
  func.func @transform_12(%arg0: i32, %arg1: i32) -> (i32, i32, i32) {
    %c0_i32 = arith.constant 0 : i32
    %c0_i32_0 = arith.constant 0 : i32
    %c0_i32_1 = arith.constant 0 : i32
    return %arg1, %c0_i32, %c0_i32_0 : i32, i32, i32
  }
  func.func @transform_13(%arg0: i32, %arg1: i32) -> (i32, i32, i32) {
    %c0_i32 = arith.constant 0 : i32
    %c0_i32_0 = arith.constant 0 : i32
    %c0_i32_1 = arith.constant 0 : i32
    return %arg1, %c0_i32, %c0_i32_0 : i32, i32, i32
  }
  func.func @transform_14(%arg0: i32, %arg1: i32) -> (i32, i32, i32) {
    %c0_i32 = arith.constant 0 : i32
    %c0_i32_0 = arith.constant 0 : i32
    %c0_i32_1 = arith.constant 0 : i32
    return %arg1, %c0_i32, %c0_i32_0 : i32, i32, i32
  }
  func.func @transform_15(%arg0: i32, %arg1: i32) -> (i32, i32, i32) {
    %c0_i32 = arith.constant 0 : i32
    %c0_i32_0 = arith.constant 0 : i32
    %c0_i32_1 = arith.constant 0 : i32
    return %arg1, %c0_i32, %c0_i32_0 : i32, i32, i32
  }
  func.func @transform_16(%arg0: i32, %arg1: i32) -> (i32, i32, i32) {
    %c0_i32 = arith.constant 0 : i32
    %c0_i32_0 = arith.constant 0 : i32
    %c0_i32_1 = arith.constant 0 : i32
    return %arg1, %c0_i32, %c0_i32_0 : i32, i32, i32
  }
  func.func @transform_17(%arg0: i32, %arg1: i32) -> (i32, i32, i32) {
    %c0_i32 = arith.constant 0 : i32
    %c0_i32_0 = arith.constant 0 : i32
    %c0_i32_1 = arith.constant 0 : i32
    return %arg1, %c0_i32, %c0_i32_0 : i32, i32, i32
  }
  func.func @transform_18(%arg0: i32, %arg1: i32) -> (i32, i32) {
    %c0_i32 = arith.constant 0 : i32
    %c0_i32_0 = arith.constant 0 : i32
    return %arg0, %c0_i32 : i32, i32
  }
}

</mosaic_0001>

<llo_original>
// kernel: tpu_custom_call.1
$region0: #{tpu_custom_call.1}
  #allocation0 [shape = 'u32[]', space=smem, size = 0x4, offset = 0x4, fixed_abs, tag = 'smem constant byte address 0x4 - core index']
  #allocation1 [shape = 'u32[72,128]{1,0:T(1,128)}', space=vmem, size = 0x9000, scoped, tag = 'internal scratch']
  %s0 = inlined_call_operand.vmem [shape: f32[16,32], index: 0, kind: input, shape index: {}]
  %s1 = inlined_call_operand.vmem [shape: f32[2,1,8], index: 1, kind: input, shape index: {}]
  %s2 = inlined_call_operand.vmem [shape: bf16[2,4,32,8], index: 2, kind: input, shape index: {}]
  %s3 = inlined_call_operand.vmem [shape: f32[2,4,1,8], index: 3, kind: input, shape index: {}]
  %s4 = inlined_call_operand.vmem [shape: bf16[2,4,32,8], index: 4, kind: input, shape index: {}]
  %s5 = inlined_call_operand.vmem [shape: f32[2,4,1,8], index: 5, kind: input, shape index: {}]
  %s6 = inlined_call_operand.vmem [shape: bf16[2,4,32,8], index: 6, kind: input, shape index: {}]
  %s7 = inlined_call_operand.vmem [shape: f32[2,4,1,8], index: 7, kind: input, shape index: {}]
  %s8 = inlined_call_operand.vmem [shape: bf16[2,4,8,32], index: 8, kind: input, shape index: {}]
  %s9 = inlined_call_operand.vmem [shape: f32[2,1,32], index: 9, kind: input, shape index: {}]
  %s10 = inlined_call_operand.vmem [shape: f32[2,1,32], index: 10, kind: input, shape index: {}]
  %s11 = inlined_call_operand.vmem [shape: f32[2,1,32], index: 11, kind: input, shape index: {}]
  %s12 = inlined_call_operand.vmem [shape: bf16[2,32,64], index: 12, kind: input, shape index: {}]
  %s13 = inlined_call_operand.vmem [shape: f32[2,1,64], index: 13, kind: input, shape index: {}]
  %s14 = inlined_call_operand.vmem [shape: bf16[2,64,32], index: 14, kind: input, shape index: {}]
  %s15 = inlined_call_operand.vmem [shape: f32[2,1,32], index: 15, kind: input, shape index: {}]
  %s16 = inlined_call_operand.vmem [shape: f32[2,1,32], index: 16, kind: input, shape index: {}]
  %s17 = inlined_call_operand.vmem [shape: f32[2,1,32], index: 17, kind: input, shape index: {}]
  %s18 = inlined_call_operand.hbm [shape: f32[16,32], index: 18, kind: output, shape index: {}]
  %s19 = sld [smem:[#allocation0]]
  $region109: #{tpu_custom_call.1} parent=0
    _
  %s21 = ssub.s32 1, %s19
  %s22 = scalar_select 0, %s21, %s19
  $region1: #{tpu_custom_call.1} parent=0
    #allocation2 [shape = 'u8[8192]{0}', space=vmem, size = 0x2000, scoped, tag = 'output window, operand 0, single buffered']
    #allocation3 [shape = 's32[2]{0}', space=sflag, size = 0x8, scoped, tag = 'scoped memory for tpu_custom_call.1']
    %23 = vsyncpa [#allocation3], 0
    loop: start=0, step=1, limit=4
    $region2: #{tpu_custom_call.1} parent=1 // loop_pre_header
      _
    $region3: #{tpu_custom_call.1} parent=1 // loop_header
      %s25 = sphi 0, %s29
      %p26 = scmp.ge.s32.totalorder %s25, 4
      %s32 = sphi 0, %s44
      %s33 = sphi 0, %s40
      %s34 = sphi 0, %s32
      %s35 = sphi 0, %s33
      %s36 = sphi 0, %s34
      %s37 = sphi 0, %s35
      %s47 = sphi 0, %s49
      %s50 = sphi 0, %s47
      %s51 = sphi 0, %s50
      %s67 = sphi 0, %s51
      %s73 = sphi 0, %s75
      %s76 = sphi 0, %s73
      %s77 = sphi 0, %s76
      %s93 = sphi 0, %s77
      %s99 = sphi 0, %s101
      %s102 = sphi 0, %s99
      %s103 = sphi 0, %s102
      %s119 = sphi 0, %s103
      %s125 = sphi 0, %s127
      %s128 = sphi 0, %s125
      %s129 = sphi 0, %s128
      %s145 = sphi 0, %s129
      %s151 = sphi 0, %s153
      %s154 = sphi 0, %s151
      %s155 = sphi 0, %s154
      %s171 = sphi 0, %s155
      %s177 = sphi 0, %s179
      %s180 = sphi 0, %s177
      %s181 = sphi 0, %s180
      %s197 = sphi 0, %s181
      %s203 = sphi 0, %s205
      %s206 = sphi 0, %s203
      %s207 = sphi 0, %s206
      %s223 = sphi 0, %s207
      %s229 = sphi 0, %s231
      %s232 = sphi 0, %s229
      %s233 = sphi 0, %s232
      %s249 = sphi 0, %s233
      %s255 = sphi 0, %s257
      %s258 = sphi 0, %s255
      %s259 = sphi 0, %s258
      %s275 = sphi 0, %s259
      %s281 = sphi 0, %s283
      %s284 = sphi 0, %s281
      %s285 = sphi 0, %s284
      %s301 = sphi 0, %s285
      %s307 = sphi 0, %s309
      %s310 = sphi 0, %s307
      %s311 = sphi 0, %s310
      %s327 = sphi 0, %s311
      %s333 = sphi 0, %s335
      %s336 = sphi 0, %s333
      %s337 = sphi 0, %s336
      %s353 = sphi 0, %s337
      %s359 = sphi 0, %s361
      %s362 = sphi 0, %s359
      %s363 = sphi 0, %s362
      %s379 = sphi 0, %s363
      %s385 = sphi 0, %s387
      %s388 = sphi 0, %s385
      %s389 = sphi 0, %s388
      %s405 = sphi 0, %s389
      %s411 = sphi 0, %s413
      %s414 = sphi 0, %s411
      %s415 = sphi 0, %s414
      %s431 = sphi 0, %s415
      %s437 = sphi 0, %s439
      %s440 = sphi 0, %s437
      %s441 = sphi 0, %s440
      %s457 = sphi 0, %s441
      %s463 = sphi 0, %s465
      %s466 = sphi 0, %s463
      %s467 = sphi 0, %s466
      %s483 = sphi 0, %s467
      %s489 = sphi 0, %s491
      %s492 = sphi 0, %s489
      %s493 = sphi 0, %s492
      %s509 = sphi 0, %s493
      %s515 = sphi 0, %s517
      %s518 = sphi 0, %s515
      %s519 = sphi 0, %s518
      %s535 = sphi 0, %s519
    $region4: #{tpu_custom_call.1} parent=1 // loop_header_branch
      %28 = sbr.rel (%p26) target = $region8
    $region5: #{tpu_custom_call.1} parent=1 // loop_body
      %s30 = ssub.s32 %s25, 1
      %s31 = ssub.s32 %s25, 2
      %s38 = sadd.s32 1, %s33
      %p39 = scmp.ge.s32.totalorder %s38, 2
      %s40 = scalar_select %p39, 0, %s38
      %s41 = sadd.s32 1, %s32
      %s42 = scalar_select %p39, %s41, %s32
      %p43 = scmp.ge.s32.totalorder %s42, 1
      %s44 = scalar_select %p43, 0, %s42
      %s45 = ssub.s32 %s32, %s44
      %p46 = scmp.eq.s32.totalorder %s45, 0
      %s48 = sadd.s32 %s47, 1
      %s49 = scalar_select %p46, %s47, %s48
      %p52 = pneg %p46
      %p53 = scmp.eq.s32.totalorder %s25, 1
      %p54 = por %p52, %p53
      %p55 = scmp.ne.s32.totalorder %s47, %s50
      %p56 = scmp.eq.s32.totalorder %s25, 0
      %p57 = por %p55, %p56
      %p58 = scmp.ne.s32.totalorder %s47, %s50
      %p59 = scmp.eq.s32.totalorder %s30, 1
      %p60 = por %p58, %p59
      %p61 = scmp.ne.s32.totalorder %s50, %s51
      %p62 = scmp.eq.s32.totalorder %s30, 0
      %p63 = por %p61, %p62
      %p64 = scmp.ne.s32.totalorder %s50, %s51
      %p65 = scmp.eq.s32.totalorder %s31, 1
      %p66 = por %p64, %p65
      %p68 = scmp.ne.s32.totalorder %s51, %s67
      %p69 = scmp.eq.s32.totalorder %s31, 0
      %p70 = por %p68, %p69
      %s71 = ssub.s32 %s32, %s44
      %p72 = scmp.eq.s32.totalorder %s71, 0
      %s74 = sadd.s32 %s73, 1
      %s75 = scalar_select %p72, %s73, %s74
      %p78 = pneg %p72
      %p79 = scmp.eq.s32.totalorder %s25, 1
      %p80 = por %p78, %p79
      %p81 = scmp.ne.s32.totalorder %s73, %s76
      %p82 = scmp.eq.s32.totalorder %s25, 0
      %p83 = por %p81, %p82
      %p84 = scmp.ne.s32.totalorder %s73, %s76
      %p85 = scmp.eq.s32.totalorder %s30, 1
      %p86 = por %p84, %p85
      %p87 = scmp.ne.s32.totalorder %s76, %s77
      %p88 = scmp.eq.s32.totalorder %s30, 0
      %p89 = por %p87, %p88
      %p90 = scmp.ne.s32.totalorder %s76, %s77
      %p91 = scmp.eq.s32.totalorder %s31, 1
      %p92 = por %p90, %p91
      %p94 = scmp.ne.s32.totalorder %s77, %s93
      %p95 = scmp.eq.s32.totalorder %s31, 0
      %p96 = por %p94, %p95
      %s97 = ssub.s32 %s33, %s40
      %p98 = scmp.eq.s32.totalorder %s97, 0
      %s100 = sadd.s32 %s99, 1
      %s101 = scalar_select %p98, %s99, %s100
      %p104 = pneg %p98
      %p105 = scmp.eq.s32.totalorder %s25, 1
      %p106 = por %p104, %p105
      %p107 = scmp.ne.s32.totalorder %s99, %s102
      %p108 = scmp.eq.s32.totalorder %s25, 0
      %p109 = por %p107, %p108
      %p110 = scmp.ne.s32.totalorder %s99, %s102
      %p111 = scmp.eq.s32.totalorder %s30, 1
      %p112 = por %p110, %p111
      %p113 = scmp.ne.s32.totalorder %s102, %s103
      %p114 = scmp.eq.s32.totalorder %s30, 0
      %p115 = por %p113, %p114
      %p116 = scmp.ne.s32.totalorder %s102, %s103
      %p117 = scmp.eq.s32.totalorder %s31, 1
      %p118 = por %p116, %p117
      %p120 = scmp.ne.s32.totalorder %s103, %s119
      %p121 = scmp.eq.s32.totalorder %s31, 0
      %p122 = por %p120, %p121
      %s123 = ssub.s32 %s33, %s40
      %p124 = scmp.eq.s32.totalorder %s123, 0
      %s126 = sadd.s32 %s125, 1
      %s127 = scalar_select %p124, %s125, %s126
      %p130 = pneg %p124
      %p131 = scmp.eq.s32.totalorder %s25, 1
      %p132 = por %p130, %p131
      %p133 = scmp.ne.s32.totalorder %s125, %s128
      %p134 = scmp.eq.s32.totalorder %s25, 0
      %p135 = por %p133, %p134
      %p136 = scmp.ne.s32.totalorder %s125, %s128
      %p137 = scmp.eq.s32.totalorder %s30, 1
      %p138 = por %p136, %p137
      %p139 = scmp.ne.s32.totalorder %s128, %s129
      %p140 = scmp.eq.s32.totalorder %s30, 0
      %p141 = por %p139, %p140
      %p142 = scmp.ne.s32.totalorder %s128, %s129
      %p143 = scmp.eq.s32.totalorder %s31, 1
      %p144 = por %p142, %p143
      %p146 = scmp.ne.s32.totalorder %s129, %s145
      %p147 = scmp.eq.s32.totalorder %s31, 0
      %p148 = por %p146, %p147
      %s149 = ssub.s32 %s33, %s40
      %p150 = scmp.eq.s32.totalorder %s149, 0
      %s152 = sadd.s32 %s151, 1
      %s153 = scalar_select %p150, %s151, %s152
      %p156 = pneg %p150
      %p157 = scmp.eq.s32.totalorder %s25, 1
      %p158 = por %p156, %p157
      %p159 = scmp.ne.s32.totalorder %s151, %s154
      %p160 = scmp.eq.s32.totalorder %s25, 0
      %p161 = por %p159, %p160
      %p162 = scmp.ne.s32.totalorder %s151, %s154
      %p163 = scmp.eq.s32.totalorder %s30, 1
      %p164 = por %p162, %p163
      %p165 = scmp.ne.s32.totalorder %s154, %s155
      %p166 = scmp.eq.s32.totalorder %s30, 0
      %p167 = por %p165, %p166
      %p168 = scmp.ne.s32.totalorder %s154, %s155
      %p169 = scmp.eq.s32.totalorder %s31, 1
      %p170 = por %p168, %p169
      %p172 = scmp.ne.s32.totalorder %s155, %s171
      %p173 = scmp.eq.s32.totalorder %s31, 0
      %p174 = por %p172, %p173
      %s175 = ssub.s32 %s33, %s40
      %p176 = scmp.eq.s32.totalorder %s175, 0
      %s178 = sadd.s32 %s177, 1
      %s179 = scalar_select %p176, %s177, %s178
      %p182 = pneg %p176
      %p183 = scmp.eq.s32.totalorder %s25, 1
      %p184 = por %p182, %p183
      %p185 = scmp.ne.s32.totalorder %s177, %s180
      %p186 = scmp.eq.s32.totalorder %s25, 0
      %p187 = por %p185, %p186
      %p188 = scmp.ne.s32.totalorder %s177, %s180
      %p189 = scmp.eq.s32.totalorder %s30, 1
      %p190 = por %p188, %p189
      %p191 = scmp.ne.s32.totalorder %s180, %s181
      %p192 = scmp.eq.s32.totalorder %s30, 0
      %p193 = por %p191, %p192
      %p194 = scmp.ne.s32.totalorder %s180, %s181
      %p195 = scmp.eq.s32.totalorder %s31, 1
      %p196 = por %p194, %p195
      %p198 = scmp.ne.s32.totalorder %s181, %s197
      %p199 = scmp.eq.s32.totalorder %s31, 0
      %p200 = por %p198, %p199
      %s201 = ssub.s32 %s33, %s40
      %p202 = scmp.eq.s32.totalorder %s201, 0
      %s204 = sadd.s32 %s203, 1
      %s205 = scalar_select %p202, %s203, %s204
      %p208 = pneg %p202
      %p209 = scmp.eq.s32.totalorder %s25, 1
      %p210 = por %p208, %p209
      %p211 = scmp.ne.s32.totalorder %s203, %s206
      %p212 = scmp.eq.s32.totalorder %s25, 0
      %p213 = por %p211, %p212
      %p214 = scmp.ne.s32.totalorder %s203, %s206
      %p215 = scmp.eq.s32.totalorder %s30, 1
      %p216 = por %p214, %p215
      %p217 = scmp.ne.s32.totalorder %s206, %s207
      %p218 = scmp.eq.s32.totalorder %s30, 0
      %p219 = por %p217, %p218
      %p220 = scmp.ne.s32.totalorder %s206, %s207
      %p221 = scmp.eq.s32.totalorder %s31, 1
      %p222 = por %p220, %p221
      %p224 = scmp.ne.s32.totalorder %s207, %s223
      %p225 = scmp.eq.s32.totalorder %s31, 0
      %p226 = por %p224, %p225
      %s227 = ssub.s32 %s33, %s40
      %p228 = scmp.eq.s32.totalorder %s227, 0
      %s230 = sadd.s32 %s229, 1
      %s231 = scalar_select %p228, %s229, %s230
      %p234 = pneg %p228
      %p235 = scmp.eq.s32.totalorder %s25, 1
      %p236 = por %p234, %p235
      %p237 = scmp.ne.s32.totalorder %s229, %s232
      %p238 = scmp.eq.s32.totalorder %s25, 0
      %p239 = por %p237, %p238
      %p240 = scmp.ne.s32.totalorder %s229, %s232
      %p241 = scmp.eq.s32.totalorder %s30, 1
      %p242 = por %p240, %p241
      %p243 = scmp.ne.s32.totalorder %s232, %s233
      %p244 = scmp.eq.s32.totalorder %s30, 0
      %p245 = por %p243, %p244
      %p246 = scmp.ne.s32.totalorder %s232, %s233
      %p247 = scmp.eq.s32.totalorder %s31, 1
      %p248 = por %p246, %p247
      %p250 = scmp.ne.s32.totalorder %s233, %s249
      %p251 = scmp.eq.s32.totalorder %s31, 0
      %p252 = por %p250, %p251
      %s253 = ssub.s32 %s33, %s40
      %p254 = scmp.eq.s32.totalorder %s253, 0
      %s256 = sadd.s32 %s255, 1
      %s257 = scalar_select %p254, %s255, %s256
      %p260 = pneg %p254
      %p261 = scmp.eq.s32.totalorder %s25, 1
      %p262 = por %p260, %p261
      %p263 = scmp.ne.s32.totalorder %s255, %s258
      %p264 = scmp.eq.s32.totalorder %s25, 0
      %p265 = por %p263, %p264
      %p266 = scmp.ne.s32.totalorder %s255, %s258
      %p267 = scmp.eq.s32.totalorder %s30, 1
      %p268 = por %p266, %p267
      %p269 = scmp.ne.s32.totalorder %s258, %s259
      %p270 = scmp.eq.s32.totalorder %s30, 0
      %p271 = por %p269, %p270
      %p272 = scmp.ne.s32.totalorder %s258, %s259
      %p273 = scmp.eq.s32.totalorder %s31, 1
      %p274 = por %p272, %p273
      %p276 = scmp.ne.s32.totalorder %s259, %s275
      %p277 = scmp.eq.s32.totalorder %s31, 0
      %p278 = por %p276, %p277
      %s279 = ssub.s32 %s33, %s40
      %p280 = scmp.eq.s32.totalorder %s279, 0
      %s282 = sadd.s32 %s281, 1
      %s283 = scalar_select %p280, %s281, %s282
      %p286 = pneg %p280
      %p287 = scmp.eq.s32.totalorder %s25, 1
      %p288 = por %p286, %p287
      %p289 = scmp.ne.s32.totalorder %s281, %s284
      %p290 = scmp.eq.s32.totalorder %s25, 0
      %p291 = por %p289, %p290
      %p292 = scmp.ne.s32.totalorder %s281, %s284
      %p293 = scmp.eq.s32.totalorder %s30, 1
      %p294 = por %p292, %p293
      %p295 = scmp.ne.s32.totalorder %s284, %s285
      %p296 = scmp.eq.s32.totalorder %s30, 0
      %p297 = por %p295, %p296
      %p298 = scmp.ne.s32.totalorder %s284, %s285
      %p299 = scmp.eq.s32.totalorder %s31, 1
      %p300 = por %p298, %p299
      %p302 = scmp.ne.s32.totalorder %s285, %s301
      %p303 = scmp.eq.s32.totalorder %s31, 0
      %p304 = por %p302, %p303
      %s305 = ssub.s32 %s33, %s40
      %p306 = scmp.eq.s32.totalorder %s305, 0
      %s308 = sadd.s32 %s307, 1
      %s309 = scalar_select %p306, %s307, %s308
      %p312 = pneg %p306
      %p313 = scmp.eq.s32.totalorder %s25, 1
      %p314 = por %p312, %p313
      %p315 = scmp.ne.s32.totalorder %s307, %s310
      %p316 = scmp.eq.s32.totalorder %s25, 0
      %p317 = por %p315, %p316
      %p318 = scmp.ne.s32.totalorder %s307, %s310
      %p319 = scmp.eq.s32.totalorder %s30, 1
      %p320 = por %p318, %p319
      %p321 = scmp.ne.s32.totalorder %s310, %s311
      %p322 = scmp.eq.s32.totalorder %s30, 0
      %p323 = por %p321, %p322
      %p324 = scmp.ne.s32.totalorder %s310, %s311
      %p325 = scmp.eq.s32.totalorder %s31, 1
      %p326 = por %p324, %p325
      %p328 = scmp.ne.s32.totalorder %s311, %s327
      %p329 = scmp.eq.s32.totalorder %s31, 0
      %p330 = por %p328, %p329
      %s331 = ssub.s32 %s33, %s40
      %p332 = scmp.eq.s32.totalorder %s331, 0
      %s334 = sadd.s32 %s333, 1
      %s335 = scalar_select %p332, %s333, %s334
      %p338 = pneg %p332
      %p339 = scmp.eq.s32.totalorder %s25, 1
      %p340 = por %p338, %p339
      %p341 = scmp.ne.s32.totalorder %s333, %s336
      %p342 = scmp.eq.s32.totalorder %s25, 0
      %p343 = por %p341, %p342
      %p344 = scmp.ne.s32.totalorder %s333, %s336
      %p345 = scmp.eq.s32.totalorder %s30, 1
      %p346 = por %p344, %p345
      %p347 = scmp.ne.s32.totalorder %s336, %s337
      %p348 = scmp.eq.s32.totalorder %s30, 0
      %p349 = por %p347, %p348
      %p350 = scmp.ne.s32.totalorder %s336, %s337
      %p351 = scmp.eq.s32.totalorder %s31, 1
      %p352 = por %p350, %p351
      %p354 = scmp.ne.s32.totalorder %s337, %s353
      %p355 = scmp.eq.s32.totalorder %s31, 0
      %p356 = por %p354, %p355
      %s357 = ssub.s32 %s33, %s40
      %p358 = scmp.eq.s32.totalorder %s357, 0
      %s360 = sadd.s32 %s359, 1
      %s361 = scalar_select %p358, %s359, %s360
      %p364 = pneg %p358
      %p365 = scmp.eq.s32.totalorder %s25, 1
      %p366 = por %p364, %p365
      %p367 = scmp.ne.s32.totalorder %s359, %s362
      %p368 = scmp.eq.s32.totalorder %s25, 0
      %p369 = por %p367, %p368
      %p370 = scmp.ne.s32.totalorder %s359, %s362
      %p371 = scmp.eq.s32.totalorder %s30, 1
      %p372 = por %p370, %p371
      %p373 = scmp.ne.s32.totalorder %s362, %s363
      %p374 = scmp.eq.s32.totalorder %s30, 0
      %p375 = por %p373, %p374
      %p376 = scmp.ne.s32.totalorder %s362, %s363
      %p377 = scmp.eq.s32.totalorder %s31, 1
      %p378 = por %p376, %p377
      %p380 = scmp.ne.s32.totalorder %s363, %s379
      %p381 = scmp.eq.s32.totalorder %s31, 0
      %p382 = por %p380, %p381
      %s383 = ssub.s32 %s33, %s40
      %p384 = scmp.eq.s32.totalorder %s383, 0
      %s386 = sadd.s32 %s385, 1
      %s387 = scalar_select %p384, %s385, %s386
      %p390 = pneg %p384
      %p391 = scmp.eq.s32.totalorder %s25, 1
      %p392 = por %p390, %p391
      %p393 = scmp.ne.s32.totalorder %s385, %s388
      %p394 = scmp.eq.s32.totalorder %s25, 0
      %p395 = por %p393, %p394
      %p396 = scmp.ne.s32.totalorder %s385, %s388
      %p397 = scmp.eq.s32.totalorder %s30, 1
      %p398 = por %p396, %p397
      %p399 = scmp.ne.s32.totalorder %s388, %s389
      %p400 = scmp.eq.s32.totalorder %s30, 0
      %p401 = por %p399, %p400
      %p402 = scmp.ne.s32.totalorder %s388, %s389
      %p403 = scmp.eq.s32.totalorder %s31, 1
      %p404 = por %p402, %p403
      %p406 = scmp.ne.s32.totalorder %s389, %s405
      %p407 = scmp.eq.s32.totalorder %s31, 0
      %p408 = por %p406, %p407
      %s409 = ssub.s32 %s33, %s40
      %p410 = scmp.eq.s32.totalorder %s409, 0
      %s412 = sadd.s32 %s411, 1
      %s413 = scalar_select %p410, %s411, %s412
      %p416 = pneg %p410
      %p417 = scmp.eq.s32.totalorder %s25, 1
      %p418 = por %p416, %p417
      %p419 = scmp.ne.s32.totalorder %s411, %s414
      %p420 = scmp.eq.s32.totalorder %s25, 0
      %p421 = por %p419, %p420
      %p422 = scmp.ne.s32.totalorder %s411, %s414
      %p423 = scmp.eq.s32.totalorder %s30, 1
      %p424 = por %p422, %p423
      %p425 = scmp.ne.s32.totalorder %s414, %s415
      %p426 = scmp.eq.s32.totalorder %s30, 0
      %p427 = por %p425, %p426
      %p428 = scmp.ne.s32.totalorder %s414, %s415
      %p429 = scmp.eq.s32.totalorder %s31, 1
      %p430 = por %p428, %p429
      %p432 = scmp.ne.s32.totalorder %s415, %s431
      %p433 = scmp.eq.s32.totalorder %s31, 0
      %p434 = por %p432, %p433
      %s435 = ssub.s32 %s33, %s40
      %p436 = scmp.eq.s32.totalorder %s435, 0
      %s438 = sadd.s32 %s437, 1
      %s439 = scalar_select %p436, %s437, %s438
      %p442 = pneg %p436
      %p443 = scmp.eq.s32.totalorder %s25, 1
      %p444 = por %p442, %p443
      %p445 = scmp.ne.s32.totalorder %s437, %s440
      %p446 = scmp.eq.s32.totalorder %s25, 0
      %p447 = por %p445, %p446
      %p448 = scmp.ne.s32.totalorder %s437, %s440
      %p449 = scmp.eq.s32.totalorder %s30, 1
      %p450 = por %p448, %p449
      %p451 = scmp.ne.s32.totalorder %s440, %s441
      %p452 = scmp.eq.s32.totalorder %s30, 0
      %p453 = por %p451, %p452
      %p454 = scmp.ne.s32.totalorder %s440, %s441
      %p455 = scmp.eq.s32.totalorder %s31, 1
      %p456 = por %p454, %p455
      %p458 = scmp.ne.s32.totalorder %s441, %s457
      %p459 = scmp.eq.s32.totalorder %s31, 0
      %p460 = por %p458, %p459
      %s461 = ssub.s32 %s33, %s40
      %p462 = scmp.eq.s32.totalorder %s461, 0
      %s464 = sadd.s32 %s463, 1
      %s465 = scalar_select %p462, %s463, %s464
      %p468 = pneg %p462
      %p469 = scmp.eq.s32.totalorder %s25, 1
      %p470 = por %p468, %p469
      %p471 = scmp.ne.s32.totalorder %s463, %s466
      %p472 = scmp.eq.s32.totalorder %s25, 0
      %p473 = por %p471, %p472
      %p474 = scmp.ne.s32.totalorder %s463, %s466
      %p475 = scmp.eq.s32.totalorder %s30, 1
      %p476 = por %p474, %p475
      %p477 = scmp.ne.s32.totalorder %s466, %s467
      %p478 = scmp.eq.s32.totalorder %s30, 0
      %p479 = por %p477, %p478
      %p480 = scmp.ne.s32.totalorder %s466, %s467
      %p481 = scmp.eq.s32.totalorder %s31, 1
      %p482 = por %p480, %p481
      %p484 = scmp.ne.s32.totalorder %s467, %s483
      %p485 = scmp.eq.s32.totalorder %s31, 0
      %p486 = por %p484, %p485
      %s487 = ssub.s32 %s33, %s40
      %p488 = scmp.eq.s32.totalorder %s487, 0
      %s490 = sadd.s32 %s489, 1
      %s491 = scalar_select %p488, %s489, %s490
      %p494 = pneg %p488
      %p495 = scmp.eq.s32.totalorder %s25, 1
      %p496 = por %p494, %p495
      %p497 = scmp.ne.s32.totalorder %s489, %s492
      %p498 = scmp.eq.s32.totalorder %s25, 0
      %p499 = por %p497, %p498
      %p500 = scmp.ne.s32.totalorder %s489, %s492
      %p501 = scmp.eq.s32.totalorder %s30, 1
      %p502 = por %p500, %p501
      %p503 = scmp.ne.s32.totalorder %s492, %s493
      %p504 = scmp.eq.s32.totalorder %s30, 0
      %p505 = por %p503, %p504
      %p506 = scmp.ne.s32.totalorder %s492, %s493
      %p507 = scmp.eq.s32.totalorder %s31, 1
      %p508 = por %p506, %p507
      %p510 = scmp.ne.s32.totalorder %s493, %s509
      %p511 = scmp.eq.s32.totalorder %s31, 0
      %p512 = por %p510, %p511
      %s513 = ssub.s32 %s32, %s44
      %p514 = scmp.eq.s32.totalorder %s513, 0
      %s516 = sadd.s32 %s515, 1
      %s517 = scalar_select %p514, %s515, %s516
      %p520 = pneg %p514
      %p521 = scmp.eq.s32.totalorder %s25, 1
      %p522 = por %p520, %p521
      %p523 = scmp.ne.s32.totalorder %s515, %s518
      %p524 = scmp.eq.s32.totalorder %s25, 0
      %p525 = por %p523, %p524
      %p526 = scmp.ne.s32.totalorder %s515, %s518
      %p527 = scmp.eq.s32.totalorder %s30, 1
      %p528 = por %p526, %p527
      %p529 = scmp.ne.s32.totalorder %s518, %s519
      %p530 = scmp.eq.s32.totalorder %s30, 0
      %p531 = por %p529, %p530
      %p532 = scmp.ne.s32.totalorder %s518, %s519
      %p533 = scmp.eq.s32.totalorder %s31, 1
      %p534 = por %p532, %p533
      %p536 = scmp.ne.s32.totalorder %s519, %s535
      %p537 = scmp.eq.s32.totalorder %s31, 0
      %p538 = por %p536, %p537
      %p539 = scmp.le.s32.totalorder 1, %s25
      %p540 = scmp.lt.s32.totalorder %s25, 3
      %p541 = pnand %p539, %p540
      %p542 = pneg %p541
      // Predicated region
      $region9: #{tpu_custom_call.1} parent=5 // pred_check
        _
      $region10: #{tpu_custom_call.1} parent=5 // pred_check_branch
        %544 = sbr.rel (%p541) target = $region12
      $region11: #{tpu_custom_call.1} parent=5 // pred_region
        %s545 = ssub.s32 %s25, 1
        // Predicated region
        $region13: #{tpu_custom_call.1} parent=11 // pred_check
          %p546 = pneg %p63
        $region14: #{tpu_custom_call.1} parent=11 // pred_check_branch
          %548 = sbr.rel (%p546) target = $region16
        $region15: #{tpu_custom_call.1} parent=11 // pred_region
          %s549 = smul.u32 2, %s34
          %p550 = scmp.lt.s32.totalorder %s549, 1
          %s551 = scalar_select %p550, %s549, 1
          %s552 = smul.addr %s551, 8
          %s553 = scalar_lea.vmem %s0, %s552
          %s554 = smul.u32 2, %s34
        $region16: #{tpu_custom_call.1} parent=11 // pred_fallthru
          _
        // Predicated region
        $region17: #{tpu_custom_call.1} parent=11 // pred_check
          %p555 = pneg %p89
        $region18: #{tpu_custom_call.1} parent=11 // pred_check_branch
          %557 = sbr.rel (%p555) target = $region20
        $region19: #{tpu_custom_call.1} parent=11 // pred_region
          %s558 = smul.u32 2, %s34
          %p559 = scmp.lt.s32.totalorder %s558, 1
          %s560 = scalar_select %p559, %s558, 1
          %s561 = scalar_lea.vmem %s1, %s560
          %s562 = smul.u32 2, %s34
        $region20: #{tpu_custom_call.1} parent=11 // pred_fallthru
          _
      $region12: #{tpu_custom_call.1} parent=5 // pred_fallthru
        _
      %p563 = scmp.lt.s32.totalorder %s25, 2
      // Predicated region
      $region21: #{tpu_custom_call.1} parent=5 // pred_check
        %p564 = pneg %p563
      $region22: #{tpu_custom_call.1} parent=5 // pred_check_branch
        %566 = sbr.rel (%p564) target = $region24
      $region23: #{tpu_custom_call.1} parent=5 // pred_region
        // Predicated region
        $region25: #{tpu_custom_call.1} parent=23 // pred_check
          %p567 = pneg %p109
        $region26: #{tpu_custom_call.1} parent=23 // pred_check_branch
          %569 = sbr.rel (%p567) target = $region28
        $region27: #{tpu_custom_call.1} parent=23 // pred_region
          %p570 = scmp.lt.s32.totalorder %s33, 1
          %s571 = scalar_select %p570, %s33, 1
          %s572 = smul.addr %s571, 16
          %s573 = smul.addr %s572, 4
          %s574 = scalar_lea.vmem %s2, %s573
        $region28: #{tpu_custom_call.1} parent=23 // pred_fallthru
          _
        // Predicated region
        $region29: #{tpu_custom_call.1} parent=23 // pred_check
          %p575 = pneg %p135
        $region30: #{tpu_custom_call.1} parent=23 // pred_check_branch
          %577 = sbr.rel (%p575) target = $region32
        $region31: #{tpu_custom_call.1} parent=23 // pred_region
          %p578 = scmp.lt.s32.totalorder %s33, 1
          %s579 = scalar_select %p578, %s33, 1
          %s580 = smul.addr %s579, 4
          %s581 = scalar_lea.vmem %s3, %s580
        $region32: #{tpu_custom_call.1} parent=23 // pred_fallthru
          _
        // Predicated region
        $region33: #{tpu_custom_call.1} parent=23 // pred_check
          %p582 = pneg %p161
        $region34: #{tpu_custom_call.1} parent=23 // pred_check_branch
          %584 = sbr.rel (%p582) target = $region36
        $region35: #{tpu_custom_call.1} parent=23 // pred_region
          %p585 = scmp.lt.s32.totalorder %s33, 1
          %s586 = scalar_select %p585, %s33, 1
          %s587 = smul.addr %s586, 16
          %s588 = smul.addr %s587, 4
          %s589 = scalar_lea.vmem %s4, %s588
        $region36: #{tpu_custom_call.1} parent=23 // pred_fallthru
          _
        // Predicated region
        $region37: #{tpu_custom_call.1} parent=23 // pred_check
          %p590 = pneg %p187
        $region38: #{tpu_custom_call.1} parent=23 // pred_check_branch
          %592 = sbr.rel (%p590) target = $region40
        $region39: #{tpu_custom_call.1} parent=23 // pred_region
          %p593 = scmp.lt.s32.totalorder %s33, 1
          %s594 = scalar_select %p593, %s33, 1
          %s595 = smul.addr %s594, 4
          %s596 = scalar_lea.vmem %s5, %s595
        $region40: #{tpu_custom_call.1} parent=23 // pred_fallthru
          _
        // Predicated region
        $region41: #{tpu_custom_call.1} parent=23 // pred_check
          %p597 = pneg %p213
        $region42: #{tpu_custom_call.1} parent=23 // pred_check_branch
          %599 = sbr.rel (%p597) target = $region44
        $region43: #{tpu_custom_call.1} parent=23 // pred_region
          %p600 = scmp.lt.s32.totalorder %s33, 1
          %s601 = scalar_select %p600, %s33, 1
          %s602 = smul.addr %s601, 16
          %s603 = smul.addr %s602, 4
          %s604 = scalar_lea.vmem %s6, %s603
        $region44: #{tpu_custom_call.1} parent=23 // pred_fallthru
          _
        // Predicated region
        $region45: #{tpu_custom_call.1} parent=23 // pred_check
          %p605 = pneg %p239
        $region46: #{tpu_custom_call.1} parent=23 // pred_check_branch
          %607 = sbr.rel (%p605) target = $region48
        $region47: #{tpu_custom_call.1} parent=23 // pred_region
          %p608 = scmp.lt.s32.totalorder %s33, 1
          %s609 = scalar_select %p608, %s33, 1
          %s610 = smul.addr %s609, 4
          %s611 = scalar_lea.vmem %s7, %s610
        $region48: #{tpu_custom_call.1} parent=23 // pred_fallthru
          _
        // Predicated region
        $region49: #{tpu_custom_call.1} parent=23 // pred_check
          %p612 = pneg %p265
        $region50: #{tpu_custom_call.1} parent=23 // pred_check_branch
          %614 = sbr.rel (%p612) target = $region52
        $region51: #{tpu_custom_call.1} parent=23 // pred_region
          %p615 = scmp.lt.s32.totalorder %s33, 1
          %s616 = scalar_select %p615, %s33, 1
          %s617 = smul.addr %s616, 4
          %s618 = smul.addr %s617, 4
          %s619 = scalar_lea.vmem %s8, %s618
        $region52: #{tpu_custom_call.1} parent=23 // pred_fallthru
          _
        // Predicated region
        $region53: #{tpu_custom_call.1} parent=23 // pred_check
          %p620 = pneg %p291
        $region54: #{tpu_custom_call.1} parent=23 // pred_check_branch
          %622 = sbr.rel (%p620) target = $region56
        $region55: #{tpu_custom_call.1} parent=23 // pred_region
          %p623 = scmp.lt.s32.totalorder %s33, 1
          %s624 = scalar_select %p623, %s33, 1
          %s625 = scalar_lea.vmem %s9, %s624
        $region56: #{tpu_custom_call.1} parent=23 // pred_fallthru
          _
        // Predicated region
        $region57: #{tpu_custom_call.1} parent=23 // pred_check
          %p626 = pneg %p317
        $region58: #{tpu_custom_call.1} parent=23 // pred_check_branch
          %628 = sbr.rel (%p626) target = $region60
        $region59: #{tpu_custom_call.1} parent=23 // pred_region
          %p629 = scmp.lt.s32.totalorder %s33, 1
          %s630 = scalar_select %p629, %s33, 1
          %s631 = scalar_lea.vmem %s10, %s630
        $region60: #{tpu_custom_call.1} parent=23 // pred_fallthru
          _
        // Predicated region
        $region61: #{tpu_custom_call.1} parent=23 // pred_check
          %p632 = pneg %p343
        $region62: #{tpu_custom_call.1} parent=23 // pred_check_branch
          %634 = sbr.rel (%p632) target = $region64
        $region63: #{tpu_custom_call.1} parent=23 // pred_region
          %p635 = scmp.lt.s32.totalorder %s33, 1
          %s636 = scalar_select %p635, %s33, 1
          %s637 = scalar_lea.vmem %s11, %s636
        $region64: #{tpu_custom_call.1} parent=23 // pred_fallthru
          _
        // Predicated region
        $region65: #{tpu_custom_call.1} parent=23 // pred_check
          %p638 = pneg %p369
        $region66: #{tpu_custom_call.1} parent=23 // pred_check_branch
          %640 = sbr.rel (%p638) target = $region68
        $region67: #{tpu_custom_call.1} parent=23 // pred_region
          %p641 = scmp.lt.s32.totalorder %s33, 1
          %s642 = scalar_select %p641, %s33, 1
          %s643 = smul.addr %s642, 4
          %s644 = smul.addr %s643, 4
          %s645 = scalar_lea.vmem %s12, %s644
        $region68: #{tpu_custom_call.1} parent=23 // pred_fallthru
          _
        // Predicated region
        $region69: #{tpu_custom_call.1} parent=23 // pred_check
          %p646 = pneg %p395
        $region70: #{tpu_custom_call.1} parent=23 // pred_check_branch
          %648 = sbr.rel (%p646) target = $region72
        $region71: #{tpu_custom_call.1} parent=23 // pred_region
          %p649 = scmp.lt.s32.totalorder %s33, 1
          %s650 = scalar_select %p649, %s33, 1
          %s651 = scalar_lea.vmem %s13, %s650
        $region72: #{tpu_custom_call.1} parent=23 // pred_fallthru
          _
        // Predicated region
        $region73: #{tpu_custom_call.1} parent=23 // pred_check
          %p652 = pneg %p421
        $region74: #{tpu_custom_call.1} parent=23 // pred_check_branch
          %654 = sbr.rel (%p652) target = $region76
        $region75: #{tpu_custom_call.1} parent=23 // pred_region
          %p655 = scmp.lt.s32.totalorder %s33, 1
          %s656 = scalar_select %p655, %s33, 1
          %s657 = smul.addr %s656, 8
          %s658 = smul.addr %s657, 4
          %s659 = scalar_lea.vmem %s14, %s658
        $region76: #{tpu_custom_call.1} parent=23 // pred_fallthru
          _
        // Predicated region
        $region77: #{tpu_custom_call.1} parent=23 // pred_check
          %p660 = pneg %p447
        $region78: #{tpu_custom_call.1} parent=23 // pred_check_branch
          %662 = sbr.rel (%p660) target = $region80
        $region79: #{tpu_custom_call.1} parent=23 // pred_region
          %p663 = scmp.lt.s32.totalorder %s33, 1
          %s664 = scalar_select %p663, %s33, 1
          %s665 = scalar_lea.vmem %s15, %s664
        $region80: #{tpu_custom_call.1} parent=23 // pred_fallthru
          _
        // Predicated region
        $region81: #{tpu_custom_call.1} parent=23 // pred_check
          %p666 = pneg %p473
        $region82: #{tpu_custom_call.1} parent=23 // pred_check_branch
          %668 = sbr.rel (%p666) target = $region84
        $region83: #{tpu_custom_call.1} parent=23 // pred_region
          %p669 = scmp.lt.s32.totalorder %s33, 1
          %s670 = scalar_select %p669, %s33, 1
          %s671 = scalar_lea.vmem %s16, %s670
        $region84: #{tpu_custom_call.1} parent=23 // pred_fallthru
          _
        // Predicated region
        $region85: #{tpu_custom_call.1} parent=23 // pred_check
          %p672 = pneg %p499
        $region86: #{tpu_custom_call.1} parent=23 // pred_check_branch
          %674 = sbr.rel (%p672) target = $region88
        $region87: #{tpu_custom_call.1} parent=23 // pred_region
          %p675 = scmp.lt.s32.totalorder %s33, 1
          %s676 = scalar_select %p675, %s33, 1
          %s677 = scalar_lea.vmem %s17, %s676
        $region88: #{tpu_custom_call.1} parent=23 // pred_fallthru
          _
      $region24: #{tpu_custom_call.1} parent=5 // pred_fallthru
        _
      %p678 = scmp.le.s32.totalorder 1, %s25
      %p679 = scmp.lt.s32.totalorder %s25, 3
      %p680 = pnand %p678, %p679
      %p681 = pneg %p680
      // Predicated region
      $region89: #{tpu_custom_call.1} parent=5 // pred_check
        _
      $region90: #{tpu_custom_call.1} parent=5 // pred_check_branch
        %683 = sbr.rel (%p680) target = $region92
      $region91: #{tpu_custom_call.1} parent=5 // pred_region
        %s684 = ssub.s32 %s25, 1
        %s685 = smul.u32 2, %s34
        %p686 = scmp.lt.s32.totalorder %s685, 1
        %s687 = scalar_select %p686, %s685, 1
        %s688 = smul.addr %s687, 8
        %s689 = scalar_lea.vmem %s0, %s688
        %p690 = pneg %p63
        %p691 = pneg %p60
        %s692 = smul.u32 2, %s34
        %p693 = scmp.lt.s32.totalorder %s692, 1
        %s694 = scalar_select %p693, %s692, 1
        %s695 = scalar_lea.vmem %s1, %s694
        %p696 = pneg %p89
        %p697 = pneg %p86
        %p698 = scmp.lt.s32.totalorder %s35, 1
        %s699 = scalar_select %p698, %s35, 1
        %s700 = smul.addr %s699, 16
        %s701 = smul.addr %s700, 4
        %s702 = scalar_lea.vmem %s2, %s701
        %p703 = pneg %p115
        %p704 = pneg %p112
        %p705 = scmp.lt.s32.totalorder %s35, 1
        %s706 = scalar_select %p705, %s35, 1
        %s707 = smul.addr %s706, 4
        %s708 = scalar_lea.vmem %s3, %s707
        %p709 = pneg %p141
        %p710 = pneg %p138
        %p711 = scmp.lt.s32.totalorder %s35, 1
        %s712 = scalar_select %p711, %s35, 1
        %s713 = smul.addr %s712, 16
        %s714 = smul.addr %s713, 4
        %s715 = scalar_lea.vmem %s4, %s714
        %p716 = pneg %p167
        %p717 = pneg %p164
        %p718 = scmp.lt.s32.totalorder %s35, 1
        %s719 = scalar_select %p718, %s35, 1
        %s720 = smul.addr %s719, 4
        %s721 = scalar_lea.vmem %s5, %s720
        %p722 = pneg %p193
        %p723 = pneg %p190
        %p724 = scmp.lt.s32.totalorder %s35, 1
        %s725 = scalar_select %p724, %s35, 1
        %s726 = smul.addr %s725, 16
        %s727 = smul.addr %s726, 4
        %s728 = scalar_lea.vmem %s6, %s727
        %p729 = pneg %p219
        %p730 = pneg %p216
        %p731 = scmp.lt.s32.totalorder %s35, 1
        %s732 = scalar_select %p731, %s35, 1
        %s733 = smul.addr %s732, 4
        %s734 = scalar_lea.vmem %s7, %s733
        %p735 = pneg %p245
        %p736 = pneg %p242
        %p737 = scmp.lt.s32.totalorder %s35, 1
        %s738 = scalar_select %p737, %s35, 1
        %s739 = smul.addr %s738, 4
        %s740 = smul.addr %s739, 4
        %s741 = scalar_lea.vmem %s8, %s740
        %p742 = pneg %p271
        %p743 = pneg %p268
        %p744 = scmp.lt.s32.totalorder %s35, 1
        %s745 = scalar_select %p744, %s35, 1
        %s746 = scalar_lea.vmem %s9, %s745
        %p747 = pneg %p297
        %p748 = pneg %p294
        %p749 = scmp.lt.s32.totalorder %s35, 1
        %s750 = scalar_select %p749, %s35, 1
        %s751 = scalar_lea.vmem %s10, %s750
        %p752 = pneg %p323
        %p753 = pneg %p320
        %p754 = scmp.lt.s32.totalorder %s35, 1
        %s755 = scalar_select %p754, %s35, 1
        %s756 = scalar_lea.vmem %s11, %s755
        %p757 = pneg %p349
        %p758 = pneg %p346
        %p759 = scmp.lt.s32.totalorder %s35, 1
        %s760 = scalar_select %p759, %s35, 1
        %s761 = smul.addr %s760, 4
        %s762 = smul.addr %s761, 4
        %s763 = scalar_lea.vmem %s12, %s762
        %p764 = pneg %p375
        %p765 = pneg %p372
        %p766 = scmp.lt.s32.totalorder %s35, 1
        %s767 = scalar_select %p766, %s35, 1
        %s768 = scalar_lea.vmem %s13, %s767
        %p769 = pneg %p401
        %p770 = pneg %p398
        %p771 = scmp.lt.s32.totalorder %s35, 1
        %s772 = scalar_select %p771, %s35, 1
        %s773 = smul.addr %s772, 8
        %s774 = smul.addr %s773, 4
        %s775 = scalar_lea.vmem %s14, %s774
        %p776 = pneg %p427
        %p777 = pneg %p424
        %p778 = scmp.lt.s32.totalorder %s35, 1
        %s779 = scalar_select %p778, %s35, 1
        %s780 = scalar_lea.vmem %s15, %s779
        %p781 = pneg %p453
        %p782 = pneg %p450
        %p783 = scmp.lt.s32.totalorder %s35, 1
        %s784 = scalar_select %p783, %s35, 1
        %s785 = scalar_lea.vmem %s16, %s784
        %p786 = pneg %p479
        %p787 = pneg %p476
        %p788 = scmp.lt.s32.totalorder %s35, 1
        %s789 = scalar_select %p788, %s35, 1
        %s790 = scalar_lea.vmem %s17, %s789
        %p791 = pneg %p505
        %p792 = pneg %p502
        %p793 = pneg %p531
        %p794 = pneg %p528
        %s795 = smul.u32 2, %s34
        %p796 = scmp.lt.s32.totalorder %s795, 1
        %s797 = scalar_select %p796, %s795, 1
        %s798 = smul.addr %s797, 8
        %s799 = scalar_lea.vmem %s0, %s798
        %s800 = smul.u32 2, %s34
        %s801 = smul.u32 2, %s34
        %p802 = scmp.lt.s32.totalorder %s801, 1
        %s803 = scalar_select %p802, %s801, 1
        %s804 = scalar_lea.vmem %s1, %s803
        %s805 = smul.u32 2, %s34
        %p806 = scmp.lt.s32.totalorder %s35, 1
        %s807 = scalar_select %p806, %s35, 1
        %s808 = smul.addr %s807, 16
        %s809 = smul.addr %s808, 4
        %s810 = scalar_lea.vmem %s2, %s809
        %p811 = scmp.lt.s32.totalorder %s35, 1
        %s812 = scalar_select %p811, %s35, 1
        %s813 = smul.addr %s812, 4
        %s814 = scalar_lea.vmem %s3, %s813
        %p815 = scmp.lt.s32.totalorder %s35, 1
        %s816 = scalar_select %p815, %s35, 1
        %s817 = smul.addr %s816, 16
        %s818 = smul.addr %s817, 4
        %s819 = scalar_lea.vmem %s4, %s818
        %p820 = scmp.lt.s32.totalorder %s35, 1
        %s821 = scalar_select %p820, %s35, 1
        %s822 = smul.addr %s821, 4
        %s823 = scalar_lea.vmem %s5, %s822
        %p824 = scmp.lt.s32.totalorder %s35, 1
        %s825 = scalar_select %p824, %s35, 1
        %s826 = smul.addr %s825, 16
        %s827 = smul.addr %s826, 4
        %s828 = scalar_lea.vmem %s6, %s827
        %p829 = scmp.lt.s32.totalorder %s35, 1
        %s830 = scalar_select %p829, %s35, 1
        %s831 = smul.addr %s830, 4
        %s832 = scalar_lea.vmem %s7, %s831
        %p833 = scmp.lt.s32.totalorder %s35, 1
        %s834 = scalar_select %p833, %s35, 1
        %s835 = smul.addr %s834, 4
        %s836 = smul.addr %s835, 4
        %s837 = scalar_lea.vmem %s8, %s836
        %p838 = scmp.lt.s32.totalorder %s35, 1
        %s839 = scalar_select %p838, %s35, 1
        %s840 = scalar_lea.vmem %s9, %s839
        %p841 = scmp.lt.s32.totalorder %s35, 1
        %s842 = scalar_select %p841, %s35, 1
        %s843 = scalar_lea.vmem %s10, %s842
        %p844 = scmp.lt.s32.totalorder %s35, 1
        %s845 = scalar_select %p844, %s35, 1
        %s846 = scalar_lea.vmem %s11, %s845
        %p847 = scmp.lt.s32.totalorder %s35, 1
        %s848 = scalar_select %p847, %s35, 1
        %s849 = smul.addr %s848, 4
        %s850 = smul.addr %s849, 4
        %s851 = scalar_lea.vmem %s12, %s850
        %p852 = scmp.lt.s32.totalorder %s35, 1
        %s853 = scalar_select %p852, %s35, 1
        %s854 = scalar_lea.vmem %s13, %s853
        %p855 = scmp.lt.s32.totalorder %s35, 1
        %s856 = scalar_select %p855, %s35, 1
        %s857 = smul.addr %s856, 8
        %s858 = smul.addr %s857, 4
        %s859 = scalar_lea.vmem %s14, %s858
        %p860 = scmp.lt.s32.totalorder %s35, 1
        %s861 = scalar_select %p860, %s35, 1
        %s862 = scalar_lea.vmem %s15, %s861
        %p863 = scmp.lt.s32.totalorder %s35, 1
        %s864 = scalar_select %p863, %s35, 1
        %s865 = scalar_lea.vmem %s16, %s864
        %p866 = scmp.lt.s32.totalorder %s35, 1
        %s867 = scalar_select %p866, %s35, 1
        %s868 = scalar_lea.vmem %s17, %s867
        %s869 = smul.u32 2, %s34
        %p871 = scmp.eq.s32.totalorder %s35, 0
        // Predicated region
        $region93: #{tpu_custom_call.1} parent=91 // pred_check
          %p872 = pneg %p871
        $region94: #{tpu_custom_call.1} parent=91 // pred_check_branch
          %874 = sbr.rel (%p872) target = $region96
        $region95: #{tpu_custom_call.1} parent=91 // pred_region
          %v875 = vld [vmem:[%s799] sm:$0xff]
          %v876 = vld [vmem:[%s799 + $0x8] sm:$0xff]
          %vm877 = vcmask 261120
          %878 = vst.msk [vmem:[#allocation2] sm:$0xff] %vm877, %v875
          %879 = vst.msk [vmem:[#allocation2 + $0x8] sm:$0xff] %vm877, %v876
        $region96: #{tpu_custom_call.1} parent=91 // pred_fallthru
          _
        %v880 = vld [vmem:[#allocation2] sm:$0xff]
        %v881 = vld [vmem:[#allocation2 + $0x8] sm:$0xff]
        %v882 = vpack.c.bf16 %v881, %v880
        %v883 = vld [vmem:[%s804] sm:$0x1]
        %v884 = vld [vmem:[%s804 + $0x1] sm:$0x1]
        %v885 = vld [vmem:[%s810] sm:$0xf]
        %v886 = vld [vmem:[%s810 + $0x4] sm:$0xf]
        %v887 = vld [vmem:[%s810 + $0x8] sm:$0xf]
        %v888 = vld [vmem:[%s810 + $0xc] sm:$0xf]
        %v889 = vld [vmem:[%s814] sm:$0x1]
        %v891 = vperm.slane %v889, 0
        %v897 = vunpack.c.l.b16 %v885
        %v898 = vunpack.c.l.b16 %v886
        %v899 = vunpack.c.l.b16 %v887
        %v900 = vunpack.c.l.b16 %v888
        %v901 = vpack.c.b16 %v898, %v897
        %v902 = vpack.c.b16 %v900, %v899
        %vm905 = vcmask 261120
        %v907 = vsel %vm905, %v882, 0
        %909 = vmatpush.bf16.msra.mxu0 0
        %910 = vmatpush.bf16.msra.mxu0 0
        %911 = vmatpush.bf16.msra.mxu0 0
        %912 = vmatpush.bf16.msra.mxu0 0
        %913 = vmatpush.bf16.msra.mxu0 0
        %914 = vmatpush.bf16.msra.mxu0 0
        %915 = vmatpush.bf16.msra.mxu0 %v902
        %916 = vmatpush.bf16.msra.mxu0 %v901
        %917 = vmatmul.bf16.gmra.mxu0 %v907
        %v918 = vpop.f32.mrf.mxu0
        %v919 = vadd.f32 %v891, %v918
        %v920 = vpop.f32.mrf.mxu0
        %v921 = vadd.f32 %v891, %v920
        %922 = vdwg.mxu0
        %v923 = vmul.f32 %v919, 0.35355338
        %v924 = vmul.f32 %v921, 0.35355338
        %v925 = vld [vmem:[%s819] sm:$0xf]
        %v926 = vld [vmem:[%s819 + $0x4] sm:$0xf]
        %v927 = vld [vmem:[%s819 + $0x8] sm:$0xf]
        %v928 = vld [vmem:[%s819 + $0xc] sm:$0xf]
        %v929 = vld [vmem:[%s823] sm:$0x1]
        %v931 = vperm.slane %v929, 0
        %v937 = vunpack.c.l.b16 %v925
        %v938 = vunpack.c.l.b16 %v926
        %v939 = vunpack.c.l.b16 %v927
        %v940 = vunpack.c.l.b16 %v928
        %v941 = vpack.c.b16 %v938, %v937
        %v942 = vpack.c.b16 %v940, %v939
        %945 = vmatpush.bf16.msra.mxu0 0
        %946 = vmatpush.bf16.msra.mxu0 0
        %947 = vmatpush.bf16.msra.mxu0 0
        %948 = vmatpush.bf16.msra.mxu0 0
        %949 = vmatpush.bf16.msra.mxu0 0
        %950 = vmatpush.bf16.msra.mxu0 0
        %951 = vmatpush.bf16.msra.mxu0 %v942
        %952 = vmatpush.bf16.msra.mxu0 %v941
        %953 = vmatmul.bf16.gmra.mxu0 %v907
        %v954 = vpop.f32.mrf.mxu0
        %v955 = vadd.f32 %v931, %v954
        %v956 = vpop.f32.mrf.mxu0
        %v957 = vadd.f32 %v931, %v956
        %958 = vdwg.mxu0
        %v959 = vld [vmem:[%s828] sm:$0xf]
        %v960 = vld [vmem:[%s828 + $0x4] sm:$0xf]
        %v961 = vld [vmem:[%s828 + $0x8] sm:$0xf]
        %v962 = vld [vmem:[%s828 + $0xc] sm:$0xf]
        %v963 = vld [vmem:[%s832] sm:$0x1]
        %v965 = vperm.slane %v963, 0
        %v971 = vunpack.c.l.b16 %v959
        %v972 = vunpack.c.l.b16 %v960
        %v973 = vunpack.c.l.b16 %v961
        %v974 = vunpack.c.l.b16 %v962
        %v975 = vpack.c.b16 %v972, %v971
        %v976 = vpack.c.b16 %v974, %v973
        %979 = vmatpush.bf16.msra.mxu0 0
        %980 = vmatpush.bf16.msra.mxu0 0
        %981 = vmatpush.bf16.msra.mxu0 0
        %982 = vmatpush.bf16.msra.mxu0 0
        %983 = vmatpush.bf16.msra.mxu0 0
        %984 = vmatpush.bf16.msra.mxu0 0
        %985 = vmatpush.bf16.msra.mxu0 %v976
        %986 = vmatpush.bf16.msra.mxu0 %v975
        %987 = vmatmul.bf16.gmra.mxu0 %v907
        %v988 = vpop.f32.mrf.mxu0
        %v989 = vadd.f32 %v965, %v988
        %v990 = vpop.f32.mrf.mxu0
        %v991 = vadd.f32 %v965, %v990
        %992 = vdwg.mxu0
        %v993 = vpack.c.bf16 %v923, %v923
        %v994 = vpack.c.bf16 %v924, %v924
        %v995 = vpack.c.bf16 %v955, %v955
        %v996 = vpack.c.bf16 %v957, %v957
        %v997 = vpack.c.bf16 %v989, %v989
        %v998 = vpack.c.bf16 %v991, %v991
        %v1001 = vperm.slane %v883, 0
        %v1002 = vperm.slane %v884, 0
        %vm1005 = vcmask 64512
        %v1007 = vsel %vm1005, %v993, 0
        %v1010 = vsel %vm1005, %v995, 0
        %1012 = vmatpush.bf16.xpose.msra.mxu0 0
        %1013 = vmatpush.bf16.xpose.msra.mxu0 0
        %1014 = vmatpush.bf16.xpose.msra.mxu0 0
        %1015 = vmatpush.bf16.xpose.msra.mxu0 0
        %1016 = vmatpush.bf16.xpose.msra.mxu0 0
        %1017 = vmatpush.bf16.xpose.msra.mxu0 0
        %1018 = vmatpush.bf16.xpose.msra.mxu0 0
        %1019 = vmatpush.bf16.xpose.msra.mxu0 %v1010
        %1020 = vmatmul.bf16.gmra.mxu0 %v1007
        %v1021 = vpop.f32.mrf.mxu0
        %v1022 = vadd.f32 %v1001, %v1021
        %v1023 = vpop.f32.mrf.mxu0
        %1024 = vdwg.mxu0
        %v1026 = vsel %vm1005, %v994, 0
        %v1029 = vsel %vm1005, %v996, 0
        %1031 = vmatpush.bf16.xpose.msra.mxu0 0
        %1032 = vmatpush.bf16.xpose.msra.mxu0 0
        %1033 = vmatpush.bf16.xpose.msra.mxu0 0
        %1034 = vmatpush.bf16.xpose.msra.mxu0 0
        %1035 = vmatpush.bf16.xpose.msra.mxu0 0
        %1036 = vmatpush.bf16.xpose.msra.mxu0 0
        %1037 = vmatpush.bf16.xpose.msra.mxu0 0
        %1038 = vmatpush.bf16.xpose.msra.mxu0 %v1029
        %1039 = vmatmul.bf16.gmra.mxu0 %v1026
        %v1040 = vpop.f32.mrf.mxu0
        %v1041 = vadd.f32 %v1002, %v1040
        %v1042 = vpop.f32.mrf.mxu0
        %1043 = vdwg.mxu0
        %v1044 = vsel %vm1005, %v1022, -inf
        %1045 = vmax.xlane.f32.xlu0 %v1044
        %v1046 = vpop.xlane.xlu0 %1045
        %v1047 = vsel %vm1005, %v1041, -inf
        %1048 = vmax.xlane.f32.xlu0 %v1047
        %v1049 = vpop.xlane.xlu0 %1048
        %v1050 = vsub.f32 %v1022, %v1046
        %v1051 = vsub.f32 %v1041, %v1049
        %v1052 = vmul.f32 %v1050, 1.442695
        %v1053 = vpow.pop %v1052
        %v1054 = vmul.f32 %v1051, 1.442695
        %v1055 = vpow.pop %v1054
        %v1056 = vsel %vm1005, %v1053, 0.0
        %1057 = vadd.xlane.f32.xlu0 %v1056
        %v1058 = vpop.xlane.xlu0 %1057
        %v1059 = vsel %vm1005, %v1055, 0.0
        %1060 = vadd.xlane.f32.xlu0 %v1059
        %v1061 = vpop.xlane.xlu0 %1060
        %v1062 = vrcp.pop %v1058
        %v1063 = vrcp.pop %v1061
        %v1064 = vpack.c.bf16 %v1053, %v1053
        %v1065 = vpack.c.bf16 %v1055, %v1055
        %v1067 = vsel %vm1005, %v1064, 0
        %vm1069 = vcmask 1043456
        %v1071 = vsel %vm1069, %v997, 0
        %1073 = vmatpush.bf16.msra.mxu0 0
        %1074 = vmatpush.bf16.msra.mxu0 0
        %1075 = vmatpush.bf16.msra.mxu0 0
        %1076 = vmatpush.bf16.msra.mxu0 0
        %1077 = vmatpush.bf16.msra.mxu0 0
        %1078 = vmatpush.bf16.msra.mxu0 0
        %1079 = vmatpush.bf16.msra.mxu0 0
        %1080 = vmatpush.bf16.msra.mxu0 %v1071
        %1081 = vmatmul.bf16.gmra.mxu0 %v1067
        %v1082 = vpop.f32.mrf.mxu0
        %v1083 = vadd.f32 0.0, %v1082
        %v1084 = vpop.f32.mrf.mxu0
        %1085 = vdwg.mxu0
        %v1087 = vsel %vm1005, %v1065, 0
        %v1090 = vsel %vm1069, %v998, 0
        %1092 = vmatpush.bf16.msra.mxu0 0
        %1093 = vmatpush.bf16.msra.mxu0 0
        %1094 = vmatpush.bf16.msra.mxu0 0
        %1095 = vmatpush.bf16.msra.mxu0 0
        %1096 = vmatpush.bf16.msra.mxu0 0
        %1097 = vmatpush.bf16.msra.mxu0 0
        %1098 = vmatpush.bf16.msra.mxu0 0
        %1099 = vmatpush.bf16.msra.mxu0 %v1090
        %1100 = vmatmul.bf16.gmra.mxu0 %v1087
        %v1101 = vpop.f32.mrf.mxu0
        %v1102 = vadd.f32 0.0, %v1101
        %v1103 = vpop.f32.mrf.mxu0
        %1104 = vdwg.mxu0
        %v1105 = vmul.f32 %v1083, %v1062
        %v1106 = vmul.f32 %v1102, %v1063
        %v1107 = vpack.c.bf16 %v1106, %v1105
        %v1108 = vld [vmem:[%s837] sm:$0xf]
        %s1109 = scalar_lea.vmem %s810, 16
        %v1110 = vld [vmem:[%s1109] sm:$0xf]
        %v1111 = vld [vmem:[%s1109 + $0x4] sm:$0xf]
        %v1112 = vld [vmem:[%s1109 + $0x8] sm:$0xf]
        %v1113 = vld [vmem:[%s1109 + $0xc] sm:$0xf]
        %s1114 = scalar_lea.vmem %s814, 1
        %v1115 = vld [vmem:[%s1114] sm:$0x1]
        %v1117 = vperm.slane %v1115, 0
        %v1123 = vunpack.c.l.b16 %v1110
        %v1124 = vunpack.c.l.b16 %v1111
        %v1125 = vunpack.c.l.b16 %v1112
        %v1126 = vunpack.c.l.b16 %v1113
        %v1127 = vpack.c.b16 %v1124, %v1123
        %v1128 = vpack.c.b16 %v1126, %v1125
        %1131 = vmatpush.bf16.msra.mxu0 0
        %1132 = vmatpush.bf16.msra.mxu0 0
        %1133 = vmatpush.bf16.msra.mxu0 0
        %1134 = vmatpush.bf16.msra.mxu0 0
        %1135 = vmatpush.bf16.msra.mxu0 0
        %1136 = vmatpush.bf16.msra.mxu0 0
        %1137 = vmatpush.bf16.msra.mxu0 %v1128
        %1138 = vmatpush.bf16.msra.mxu0 %v1127
        %1139 = vmatmul.bf16.gmra.mxu0 %v907
        %v1140 = vpop.f32.mrf.mxu0
        %v1141 = vadd.f32 %v1117, %v1140
        %v1142 = vpop.f32.mrf.mxu0
        %v1143 = vadd.f32 %v1117, %v1142
        %1144 = vdwg.mxu0
        %v1145 = vmul.f32 %v1141, 0.35355338
        %v1146 = vmul.f32 %v1143, 0.35355338
        %s1147 = scalar_lea.vmem %s819, 16
        %v1148 = vld [vmem:[%s1147] sm:$0xf]
        %v1149 = vld [vmem:[%s1147 + $0x4] sm:$0xf]
        %v1150 = vld [vmem:[%s1147 + $0x8] sm:$0xf]
        %v1151 = vld [vmem:[%s1147 + $0xc] sm:$0xf]
        %s1152 = scalar_lea.vmem %s823, 1
        %v1153 = vld [vmem:[%s1152] sm:$0x1]
        %v1155 = vperm.slane %v1153, 0
        %v1161 = vunpack.c.l.b16 %v1148
        %v1162 = vunpack.c.l.b16 %v1149
        %v1163 = vunpack.c.l.b16 %v1150
        %v1164 = vunpack.c.l.b16 %v1151
        %v1165 = vpack.c.b16 %v1162, %v1161
        %v1166 = vpack.c.b16 %v1164, %v1163
        %1169 = vmatpush.bf16.msra.mxu0 0
        %1170 = vmatpush.bf16.msra.mxu0 0
        %1171 = vmatpush.bf16.msra.mxu0 0
        %1172 = vmatpush.bf16.msra.mxu0 0
        %1173 = vmatpush.bf16.msra.mxu0 0
        %1174 = vmatpush.bf16.msra.mxu0 0
        %1175 = vmatpush.bf16.msra.mxu0 %v1166
        %1176 = vmatpush.bf16.msra.mxu0 %v1165
        %1177 = vmatmul.bf16.gmra.mxu0 %v907
        %v1178 = vpop.f32.mrf.mxu0
        %v1179 = vadd.f32 %v1155, %v1178
        %v1180 = vpop.f32.mrf.mxu0
        %v1181 = vadd.f32 %v1155, %v1180
        %1182 = vdwg.mxu0
        %s1183 = scalar_lea.vmem %s828, 16
        %v1184 = vld [vmem:[%s1183] sm:$0xf]
        %v1185 = vld [vmem:[%s1183 + $0x4] sm:$0xf]
        %v1186 = vld [vmem:[%s1183 + $0x8] sm:$0xf]
        %v1187 = vld [vmem:[%s1183 + $0xc] sm:$0xf]
        %s1188 = scalar_lea.vmem %s832, 1
        %v1189 = vld [vmem:[%s1188] sm:$0x1]
        %v1191 = vperm.slane %v1189, 0
        %v1197 = vunpack.c.l.b16 %v1184
        %v1198 = vunpack.c.l.b16 %v1185
        %v1199 = vunpack.c.l.b16 %v1186
        %v1200 = vunpack.c.l.b16 %v1187
        %v1201 = vpack.c.b16 %v1198, %v1197
        %v1202 = vpack.c.b16 %v1200, %v1199
        %1205 = vmatpush.bf16.msra.mxu0 0
        %1206 = vmatpush.bf16.msra.mxu0 0
        %1207 = vmatpush.bf16.msra.mxu0 0
        %1208 = vmatpush.bf16.msra.mxu0 0
        %1209 = vmatpush.bf16.msra.mxu0 0
        %1210 = vmatpush.bf16.msra.mxu0 0
        %1211 = vmatpush.bf16.msra.mxu0 %v1202
        %1212 = vmatpush.bf16.msra.mxu0 %v1201
        %1213 = vmatmul.bf16.gmra.mxu0 %v907
        %v1214 = vpop.f32.mrf.mxu0
        %v1215 = vadd.f32 %v1191, %v1214
        %v1216 = vpop.f32.mrf.mxu0
        %v1217 = vadd.f32 %v1191, %v1216
        %1218 = vdwg.mxu0
        %v1219 = vpack.c.bf16 %v1145, %v1145
        %v1220 = vpack.c.bf16 %v1146, %v1146
        %v1221 = vpack.c.bf16 %v1179, %v1179
        %v1222 = vpack.c.bf16 %v1181, %v1181
        %v1223 = vpack.c.bf16 %v1215, %v1215
        %v1224 = vpack.c.bf16 %v1217, %v1217
        %v1226 = vsel %vm1005, %v1219, 0
        %v1229 = vsel %vm1005, %v1221, 0
        %1231 = vmatpush.bf16.xpose.msra.mxu0 0
        %1232 = vmatpush.bf16.xpose.msra.mxu0 0
        %1233 = vmatpush.bf16.xpose.msra.mxu0 0
        %1234 = vmatpush.bf16.xpose.msra.mxu0 0
        %1235 = vmatpush.bf16.xpose.msra.mxu0 0
        %1236 = vmatpush.bf16.xpose.msra.mxu0 0
        %1237 = vmatpush.bf16.xpose.msra.mxu0 0
        %1238 = vmatpush.bf16.xpose.msra.mxu0 %v1229
        %1239 = vmatmul.bf16.gmra.mxu0 %v1226
        %v1240 = vpop.f32.mrf.mxu0
        %v1241 = vadd.f32 %v1001, %v1240
        %v1242 = vpop.f32.mrf.mxu0
        %1243 = vdwg.mxu0
        %v1245 = vsel %vm1005, %v1220, 0
        %v1248 = vsel %vm1005, %v1222, 0
        %1250 = vmatpush.bf16.xpose.msra.mxu0 0
        %1251 = vmatpush.bf16.xpose.msra.mxu0 0
        %1252 = vmatpush.bf16.xpose.msra.mxu0 0
        %1253 = vmatpush.bf16.xpose.msra.mxu0 0
        %1254 = vmatpush.bf16.xpose.msra.mxu0 0
        %1255 = vmatpush.bf16.xpose.msra.mxu0 0
        %1256 = vmatpush.bf16.xpose.msra.mxu0 0
        %1257 = vmatpush.bf16.xpose.msra.mxu0 %v1248
        %1258 = vmatmul.bf16.gmra.mxu0 %v1245
        %v1259 = vpop.f32.mrf.mxu0
        %v1260 = vadd.f32 %v1002, %v1259
        %v1261 = vpop.f32.mrf.mxu0
        %1262 = vdwg.mxu0
        %v1263 = vsel %vm1005, %v1241, -inf
        %1264 = vmax.xlane.f32.xlu0 %v1263
        %v1265 = vpop.xlane.xlu0 %1264
        %v1266 = vsel %vm1005, %v1260, -inf
        %1267 = vmax.xlane.f32.xlu0 %v1266
        %v1268 = vpop.xlane.xlu0 %1267
        %v1269 = vsub.f32 %v1241, %v1265
        %v1270 = vsub.f32 %v1260, %v1268
        %v1271 = vmul.f32 %v1269, 1.442695
        %v1272 = vpow.pop %v1271
        %v1273 = vmul.f32 %v1270, 1.442695
        %v1274 = vpow.pop %v1273
        %v1275 = vsel %vm1005, %v1272, 0.0
        %1276 = vadd.xlane.f32.xlu0 %v1275
        %v1277 = vpop.xlane.xlu0 %1276
        %v1278 = vsel %vm1005, %v1274, 0.0
        %1279 = vadd.xlane.f32.xlu0 %v1278
        %v1280 = vpop.xlane.xlu0 %1279
        %v1281 = vrcp.pop %v1277
        %v1282 = vrcp.pop %v1280
        %v1283 = vpack.c.bf16 %v1272, %v1272
        %v1284 = vpack.c.bf16 %v1274, %v1274
        %v1286 = vsel %vm1005, %v1283, 0
        %v1289 = vsel %vm1069, %v1223, 0
        %1291 = vmatpush.bf16.msra.mxu0 0
        %1292 = vmatpush.bf16.msra.mxu0 0
        %1293 = vmatpush.bf16.msra.mxu0 0
        %1294 = vmatpush.bf16.msra.mxu0 0
        %1295 = vmatpush.bf16.msra.mxu0 0
        %1296 = vmatpush.bf16.msra.mxu0 0
        %1297 = vmatpush.bf16.msra.mxu0 0
        %1298 = vmatpush.bf16.msra.mxu0 %v1289
        %1299 = vmatmul.bf16.gmra.mxu0 %v1286
        %v1300 = vpop.f32.mrf.mxu0
        %v1301 = vadd.f32 0.0, %v1300
        %v1302 = vpop.f32.mrf.mxu0
        %1303 = vdwg.mxu0
        %v1305 = vsel %vm1005, %v1284, 0
        %v1308 = vsel %vm1069, %v1224, 0
        %1310 = vmatpush.bf16.msra.mxu0 0
        %1311 = vmatpush.bf16.msra.mxu0 0
        %1312 = vmatpush.bf16.msra.mxu0 0
        %1313 = vmatpush.bf16.msra.mxu0 0
        %1314 = vmatpush.bf16.msra.mxu0 0
        %1315 = vmatpush.bf16.msra.mxu0 0
        %1316 = vmatpush.bf16.msra.mxu0 0
        %1317 = vmatpush.bf16.msra.mxu0 %v1308
        %1318 = vmatmul.bf16.gmra.mxu0 %v1305
        %v1319 = vpop.f32.mrf.mxu0
        %v1320 = vadd.f32 0.0, %v1319
        %v1321 = vpop.f32.mrf.mxu0
        %1322 = vdwg.mxu0
        %v1323 = vmul.f32 %v1301, %v1281
        %v1324 = vmul.f32 %v1320, %v1282
        %v1325 = vpack.c.bf16 %v1324, %v1323
        %s1326 = scalar_lea.vmem %s837, 4
        %v1327 = vld [vmem:[%s1326] sm:$0xf]
        %v1329 = vsel %vm1005, %v1325, 0
        %v1332 = vsel %vm1069, %v1327, 0
        %1334 = vmatpush.bf16.msra.mxu0 0
        %1335 = vmatpush.bf16.msra.mxu0 0
        %1336 = vmatpush.bf16.msra.mxu0 0
        %1337 = vmatpush.bf16.msra.mxu0 0
        %1338 = vmatpush.bf16.msra.mxu0 0
        %1339 = vmatpush.bf16.msra.mxu0 0
        %1340 = vmatpush.bf16.msra.mxu0 0
        %1341 = vmatpush.bf16.msra.mxu0 %v1332
        %1342 = vmatmul.bf16.gmra.mxu0 %v1329
        %v1343 = vpop.f32.mrf.mxu0
        %v1344 = vadd.f32 0.0, %v1343
        %v1345 = vpop.f32.mrf.mxu0
        %v1346 = vadd.f32 0.0, %v1345
        %1347 = vdwg.mxu0
        %v1349 = vsel %vm1005, %v1107, 0
        %v1352 = vsel %vm1069, %v1108, 0
        %1354 = vmatpush.bf16.msra.mxu0 0
        %1355 = vmatpush.bf16.msra.mxu0 0
        %1356 = vmatpush.bf16.msra.mxu0 0
        %1357 = vmatpush.bf16.msra.mxu0 0
        %1358 = vmatpush.bf16.msra.mxu0 0
        %1359 = vmatpush.bf16.msra.mxu0 0
        %1360 = vmatpush.bf16.msra.mxu0 0
        %1361 = vmatpush.bf16.msra.mxu0 %v1352
        %1362 = vmatmul.bf16.gmra.mxu0 %v1349
        %v1363 = vpop.f32.mrf.mxu0
        %v1364 = vadd.f32 %v1344, %v1363
        %v1365 = vpop.f32.mrf.mxu0
        %v1366 = vadd.f32 %v1346, %v1365
        %1367 = vdwg.mxu0
        %s1368 = scalar_lea.vmem %s810, 32
        %v1369 = vld [vmem:[%s1368] sm:$0xf]
        %v1370 = vld [vmem:[%s1368 + $0x4] sm:$0xf]
        %v1371 = vld [vmem:[%s1368 + $0x8] sm:$0xf]
        %v1372 = vld [vmem:[%s1368 + $0xc] sm:$0xf]
        %s1373 = scalar_lea.vmem %s814, 2
        %v1374 = vld [vmem:[%s1373] sm:$0x1]
        %v1376 = vperm.slane %v1374, 0
        %v1382 = vunpack.c.l.b16 %v1369
        %v1383 = vunpack.c.l.b16 %v1370
        %v1384 = vunpack.c.l.b16 %v1371
        %v1385 = vunpack.c.l.b16 %v1372
        %v1386 = vpack.c.b16 %v1383, %v1382
        %v1387 = vpack.c.b16 %v1385, %v1384
        %1390 = vmatpush.bf16.msra.mxu0 0
        %1391 = vmatpush.bf16.msra.mxu0 0
        %1392 = vmatpush.bf16.msra.mxu0 0
        %1393 = vmatpush.bf16.msra.mxu0 0
        %1394 = vmatpush.bf16.msra.mxu0 0
        %1395 = vmatpush.bf16.msra.mxu0 0
        %1396 = vmatpush.bf16.msra.mxu0 %v1387
        %1397 = vmatpush.bf16.msra.mxu0 %v1386
        %1398 = vmatmul.bf16.gmra.mxu0 %v907
        %v1399 = vpop.f32.mrf.mxu0
        %v1400 = vadd.f32 %v1376, %v1399
        %v1401 = vpop.f32.mrf.mxu0
        %v1402 = vadd.f32 %v1376, %v1401
        %1403 = vdwg.mxu0
        %v1404 = vmul.f32 %v1400, 0.35355338
        %v1405 = vmul.f32 %v1402, 0.35355338
        %s1406 = scalar_lea.vmem %s819, 32
        %v1407 = vld [vmem:[%s1406] sm:$0xf]
        %v1408 = vld [vmem:[%s1406 + $0x4] sm:$0xf]
        %v1409 = vld [vmem:[%s1406 + $0x8] sm:$0xf]
        %v1410 = vld [vmem:[%s1406 + $0xc] sm:$0xf]
        %s1411 = scalar_lea.vmem %s823, 2
        %v1412 = vld [vmem:[%s1411] sm:$0x1]
        %v1414 = vperm.slane %v1412, 0
        %v1420 = vunpack.c.l.b16 %v1407
        %v1421 = vunpack.c.l.b16 %v1408
        %v1422 = vunpack.c.l.b16 %v1409
        %v1423 = vunpack.c.l.b16 %v1410
        %v1424 = vpack.c.b16 %v1421, %v1420
        %v1425 = vpack.c.b16 %v1423, %v1422
        %1428 = vmatpush.bf16.msra.mxu0 0
        %1429 = vmatpush.bf16.msra.mxu0 0
        %1430 = vmatpush.bf16.msra.mxu0 0
        %1431 = vmatpush.bf16.msra.mxu0 0
        %1432 = vmatpush.bf16.msra.mxu0 0
        %1433 = vmatpush.bf16.msra.mxu0 0
        %1434 = vmatpush.bf16.msra.mxu0 %v1425
        %1435 = vmatpush.bf16.msra.mxu0 %v1424
        %1436 = vmatmul.bf16.gmra.mxu0 %v907
        %v1437 = vpop.f32.mrf.mxu0
        %v1438 = vadd.f32 %v1414, %v1437
        %v1439 = vpop.f32.mrf.mxu0
        %v1440 = vadd.f32 %v1414, %v1439
        %1441 = vdwg.mxu0
        %s1442 = scalar_lea.vmem %s828, 32
        %v1443 = vld [vmem:[%s1442] sm:$0xf]
        %v1444 = vld [vmem:[%s1442 + $0x4] sm:$0xf]
        %v1445 = vld [vmem:[%s1442 + $0x8] sm:$0xf]
        %v1446 = vld [vmem:[%s1442 + $0xc] sm:$0xf]
        %s1447 = scalar_lea.vmem %s832, 2
        %v1448 = vld [vmem:[%s1447] sm:$0x1]
        %v1450 = vperm.slane %v1448, 0
        %v1456 = vunpack.c.l.b16 %v1443
        %v1457 = vunpack.c.l.b16 %v1444
        %v1458 = vunpack.c.l.b16 %v1445
        %v1459 = vunpack.c.l.b16 %v1446
        %v1460 = vpack.c.b16 %v1457, %v1456
        %v1461 = vpack.c.b16 %v1459, %v1458
        %1464 = vmatpush.bf16.msra.mxu0 0
        %1465 = vmatpush.bf16.msra.mxu0 0
        %1466 = vmatpush.bf16.msra.mxu0 0
        %1467 = vmatpush.bf16.msra.mxu0 0
        %1468 = vmatpush.bf16.msra.mxu0 0
        %1469 = vmatpush.bf16.msra.mxu0 0
        %1470 = vmatpush.bf16.msra.mxu0 %v1461
        %1471 = vmatpush.bf16.msra.mxu0 %v1460
        %1472 = vmatmul.bf16.gmra.mxu0 %v907
        %v1473 = vpop.f32.mrf.mxu0
        %v1474 = vadd.f32 %v1450, %v1473
        %v1475 = vpop.f32.mrf.mxu0
        %v1476 = vadd.f32 %v1450, %v1475
        %1477 = vdwg.mxu0
        %v1478 = vpack.c.bf16 %v1404, %v1404
        %v1479 = vpack.c.bf16 %v1405, %v1405
        %v1480 = vpack.c.bf16 %v1438, %v1438
        %v1481 = vpack.c.bf16 %v1440, %v1440
        %v1482 = vpack.c.bf16 %v1474, %v1474
        %v1483 = vpack.c.bf16 %v1476, %v1476
        %v1485 = vsel %vm1005, %v1478, 0
        %v1488 = vsel %vm1005, %v1480, 0
        %1490 = vmatpush.bf16.xpose.msra.mxu0 0
        %1491 = vmatpush.bf16.xpose.msra.mxu0 0
        %1492 = vmatpush.bf16.xpose.msra.mxu0 0
        %1493 = vmatpush.bf16.xpose.msra.mxu0 0
        %1494 = vmatpush.bf16.xpose.msra.mxu0 0
        %1495 = vmatpush.bf16.xpose.msra.mxu0 0
        %1496 = vmatpush.bf16.xpose.msra.mxu0 0
        %1497 = vmatpush.bf16.xpose.msra.mxu0 %v1488
        %1498 = vmatmul.bf16.gmra.mxu0 %v1485
        %v1499 = vpop.f32.mrf.mxu0
        %v1500 = vadd.f32 %v1001, %v1499
        %v1501 = vpop.f32.mrf.mxu0
        %1502 = vdwg.mxu0
        %v1504 = vsel %vm1005, %v1479, 0
        %v1507 = vsel %vm1005, %v1481, 0
        %1509 = vmatpush.bf16.xpose.msra.mxu0 0
        %1510 = vmatpush.bf16.xpose.msra.mxu0 0
        %1511 = vmatpush.bf16.xpose.msra.mxu0 0
        %1512 = vmatpush.bf16.xpose.msra.mxu0 0
        %1513 = vmatpush.bf16.xpose.msra.mxu0 0
        %1514 = vmatpush.bf16.xpose.msra.mxu0 0
        %1515 = vmatpush.bf16.xpose.msra.mxu0 0
        %1516 = vmatpush.bf16.xpose.msra.mxu0 %v1507
        %1517 = vmatmul.bf16.gmra.mxu0 %v1504
        %v1518 = vpop.f32.mrf.mxu0
        %v1519 = vadd.f32 %v1002, %v1518
        %v1520 = vpop.f32.mrf.mxu0
        %1521 = vdwg.mxu0
        %v1522 = vsel %vm1005, %v1500, -inf
        %1523 = vmax.xlane.f32.xlu0 %v1522
        %v1524 = vpop.xlane.xlu0 %1523
        %v1525 = vsel %vm1005, %v1519, -inf
        %1526 = vmax.xlane.f32.xlu0 %v1525
        %v1527 = vpop.xlane.xlu0 %1526
        %v1528 = vsub.f32 %v1500, %v1524
        %v1529 = vsub.f32 %v1519, %v1527
        %v1530 = vmul.f32 %v1528, 1.442695
        %v1531 = vpow.pop %v1530
        %v1532 = vmul.f32 %v1529, 1.442695
        %v1533 = vpow.pop %v1532
        %v1534 = vsel %vm1005, %v1531, 0.0
        %1535 = vadd.xlane.f32.xlu0 %v1534
        %v1536 = vpop.xlane.xlu0 %1535
        %v1537 = vsel %vm1005, %v1533, 0.0
        %1538 = vadd.xlane.f32.xlu0 %v1537
        %v1539 = vpop.xlane.xlu0 %1538
        %v1540 = vrcp.pop %v1536
        %v1541 = vrcp.pop %v1539
        %v1542 = vpack.c.bf16 %v1531, %v1531
        %v1543 = vpack.c.bf16 %v1533, %v1533
        %v1545 = vsel %vm1005, %v1542, 0
        %v1548 = vsel %vm1069, %v1482, 0
        %1550 = vmatpush.bf16.msra.mxu0 0
        %1551 = vmatpush.bf16.msra.mxu0 0
        %1552 = vmatpush.bf16.msra.mxu0 0
        %1553 = vmatpush.bf16.msra.mxu0 0
        %1554 = vmatpush.bf16.msra.mxu0 0
        %1555 = vmatpush.bf16.msra.mxu0 0
        %1556 = vmatpush.bf16.msra.mxu0 0
        %1557 = vmatpush.bf16.msra.mxu0 %v1548
        %1558 = vmatmul.bf16.gmra.mxu0 %v1545
        %v1559 = vpop.f32.mrf.mxu0
        %v1560 = vadd.f32 0.0, %v1559
        %v1561 = vpop.f32.mrf.mxu0
        %1562 = vdwg.mxu0
        %v1564 = vsel %vm1005, %v1543, 0
        %v1567 = vsel %vm1069, %v1483, 0
        %1569 = vmatpush.bf16.msra.mxu0 0
        %1570 = vmatpush.bf16.msra.mxu0 0
        %1571 = vmatpush.bf16.msra.mxu0 0
        %1572 = vmatpush.bf16.msra.mxu0 0
        %1573 = vmatpush.bf16.msra.mxu0 0
        %1574 = vmatpush.bf16.msra.mxu0 0
        %1575 = vmatpush.bf16.msra.mxu0 0
        %1576 = vmatpush.bf16.msra.mxu0 %v1567
        %1577 = vmatmul.bf16.gmra.mxu0 %v1564
        %v1578 = vpop.f32.mrf.mxu0
        %v1579 = vadd.f32 0.0, %v1578
        %v1580 = vpop.f32.mrf.mxu0
        %1581 = vdwg.mxu0
        %v1582 = vmul.f32 %v1560, %v1540
        %v1583 = vmul.f32 %v1579, %v1541
        %v1584 = vpack.c.bf16 %v1583, %v1582
        %s1585 = scalar_lea.vmem %s837, 8
        %v1586 = vld [vmem:[%s1585] sm:$0xf]
        %v1588 = vsel %vm1005, %v1584, 0
        %v1591 = vsel %vm1069, %v1586, 0
        %1593 = vmatpush.bf16.msra.mxu0 0
        %1594 = vmatpush.bf16.msra.mxu0 0
        %1595 = vmatpush.bf16.msra.mxu0 0
        %1596 = vmatpush.bf16.msra.mxu0 0
        %1597 = vmatpush.bf16.msra.mxu0 0
        %1598 = vmatpush.bf16.msra.mxu0 0
        %1599 = vmatpush.bf16.msra.mxu0 0
        %1600 = vmatpush.bf16.msra.mxu0 %v1591
        %1601 = vmatmul.bf16.gmra.mxu0 %v1588
        %v1602 = vpop.f32.mrf.mxu0
        %v1603 = vadd.f32 0.0, %v1602
        %v1604 = vpop.f32.mrf.mxu0
        %v1605 = vadd.f32 0.0, %v1604
        %1606 = vdwg.mxu0
        %v1607 = vadd.f32 %v1364, %v1603
        %v1608 = vadd.f32 %v1366, %v1605
        %s1609 = scalar_lea.vmem %s810, 48
        %v1610 = vld [vmem:[%s1609] sm:$0xf]
        %v1611 = vld [vmem:[%s1609 + $0x4] sm:$0xf]
        %v1612 = vld [vmem:[%s1609 + $0x8] sm:$0xf]
        %v1613 = vld [vmem:[%s1609 + $0xc] sm:$0xf]
        %s1614 = scalar_lea.vmem %s814, 3
        %v1615 = vld [vmem:[%s1614] sm:$0x1]
        %v1617 = vperm.slane %v1615, 0
        %v1623 = vunpack.c.l.b16 %v1610
        %v1624 = vunpack.c.l.b16 %v1611
        %v1625 = vunpack.c.l.b16 %v1612
        %v1626 = vunpack.c.l.b16 %v1613
        %v1627 = vpack.c.b16 %v1624, %v1623
        %v1628 = vpack.c.b16 %v1626, %v1625
        %1631 = vmatpush.bf16.msra.mxu0 0
        %1632 = vmatpush.bf16.msra.mxu0 0
        %1633 = vmatpush.bf16.msra.mxu0 0
        %1634 = vmatpush.bf16.msra.mxu0 0
        %1635 = vmatpush.bf16.msra.mxu0 0
        %1636 = vmatpush.bf16.msra.mxu0 0
        %1637 = vmatpush.bf16.msra.mxu0 %v1628
        %1638 = vmatpush.bf16.msra.mxu0 %v1627
        %1639 = vmatmul.bf16.gmra.mxu0 %v907
        %v1640 = vpop.f32.mrf.mxu0
        %v1641 = vadd.f32 %v1617, %v1640
        %v1642 = vpop.f32.mrf.mxu0
        %v1643 = vadd.f32 %v1617, %v1642
        %1644 = vdwg.mxu0
        %v1645 = vmul.f32 %v1641, 0.35355338
        %v1646 = vmul.f32 %v1643, 0.35355338
        %s1647 = scalar_lea.vmem %s819, 48
        %v1648 = vld [vmem:[%s1647] sm:$0xf]
        %v1649 = vld [vmem:[%s1647 + $0x4] sm:$0xf]
        %v1650 = vld [vmem:[%s1647 + $0x8] sm:$0xf]
        %v1651 = vld [vmem:[%s1647 + $0xc] sm:$0xf]
        %s1652 = scalar_lea.vmem %s823, 3
        %v1653 = vld [vmem:[%s1652] sm:$0x1]
        %v1655 = vperm.slane %v1653, 0
        %v1661 = vunpack.c.l.b16 %v1648
        %v1662 = vunpack.c.l.b16 %v1649
        %v1663 = vunpack.c.l.b16 %v1650
        %v1664 = vunpack.c.l.b16 %v1651
        %v1665 = vpack.c.b16 %v1662, %v1661
        %v1666 = vpack.c.b16 %v1664, %v1663
        %1669 = vmatpush.bf16.msra.mxu0 0
        %1670 = vmatpush.bf16.msra.mxu0 0
        %1671 = vmatpush.bf16.msra.mxu0 0
        %1672 = vmatpush.bf16.msra.mxu0 0
        %1673 = vmatpush.bf16.msra.mxu0 0
        %1674 = vmatpush.bf16.msra.mxu0 0
        %1675 = vmatpush.bf16.msra.mxu0 %v1666
        %1676 = vmatpush.bf16.msra.mxu0 %v1665
        %1677 = vmatmul.bf16.gmra.mxu0 %v907
        %v1678 = vpop.f32.mrf.mxu0
        %v1679 = vadd.f32 %v1655, %v1678
        %v1680 = vpop.f32.mrf.mxu0
        %v1681 = vadd.f32 %v1655, %v1680
        %1682 = vdwg.mxu0
        %s1683 = scalar_lea.vmem %s828, 48
        %v1684 = vld [vmem:[%s1683] sm:$0xf]
        %v1685 = vld [vmem:[%s1683 + $0x4] sm:$0xf]
        %v1686 = vld [vmem:[%s1683 + $0x8] sm:$0xf]
        %v1687 = vld [vmem:[%s1683 + $0xc] sm:$0xf]
        %s1688 = scalar_lea.vmem %s832, 3
        %v1689 = vld [vmem:[%s1688] sm:$0x1]
        %v1691 = vperm.slane %v1689, 0
        %v1697 = vunpack.c.l.b16 %v1684
        %v1698 = vunpack.c.l.b16 %v1685
        %v1699 = vunpack.c.l.b16 %v1686
        %v1700 = vunpack.c.l.b16 %v1687
        %v1701 = vpack.c.b16 %v1698, %v1697
        %v1702 = vpack.c.b16 %v1700, %v1699
        %1705 = vmatpush.bf16.msra.mxu0 0
        %1706 = vmatpush.bf16.msra.mxu0 0
        %1707 = vmatpush.bf16.msra.mxu0 0
        %1708 = vmatpush.bf16.msra.mxu0 0
        %1709 = vmatpush.bf16.msra.mxu0 0
        %1710 = vmatpush.bf16.msra.mxu0 0
        %1711 = vmatpush.bf16.msra.mxu0 %v1702
        %1712 = vmatpush.bf16.msra.mxu0 %v1701
        %1713 = vmatmul.bf16.gmra.mxu0 %v907
        %v1714 = vpop.f32.mrf.mxu0
        %v1715 = vadd.f32 %v1691, %v1714
        %v1716 = vpop.f32.mrf.mxu0
        %v1717 = vadd.f32 %v1691, %v1716
        %1718 = vdwg.mxu0
        %v1719 = vpack.c.bf16 %v1645, %v1645
        %v1720 = vpack.c.bf16 %v1646, %v1646
        %v1721 = vpack.c.bf16 %v1679, %v1679
        %v1722 = vpack.c.bf16 %v1681, %v1681
        %v1723 = vpack.c.bf16 %v1715, %v1715
        %v1724 = vpack.c.bf16 %v1717, %v1717
        %v1726 = vsel %vm1005, %v1719, 0
        %v1729 = vsel %vm1005, %v1721, 0
        %1731 = vmatpush.bf16.xpose.msra.mxu0 0
        %1732 = vmatpush.bf16.xpose.msra.mxu0 0
        %1733 = vmatpush.bf16.xpose.msra.mxu0 0
        %1734 = vmatpush.bf16.xpose.msra.mxu0 0
        %1735 = vmatpush.bf16.xpose.msra.mxu0 0
        %1736 = vmatpush.bf16.xpose.msra.mxu0 0
        %1737 = vmatpush.bf16.xpose.msra.mxu0 0
        %1738 = vmatpush.bf16.xpose.msra.mxu0 %v1729
        %1739 = vmatmul.bf16.gmra.mxu0 %v1726
        %v1740 = vpop.f32.mrf.mxu0
        %v1741 = vadd.f32 %v1001, %v1740
        %v1742 = vpop.f32.mrf.mxu0
        %1743 = vdwg.mxu0
        %v1745 = vsel %vm1005, %v1720, 0
        %v1748 = vsel %vm1005, %v1722, 0
        %1750 = vmatpush.bf16.xpose.msra.mxu0 0
        %1751 = vmatpush.bf16.xpose.msra.mxu0 0
        %1752 = vmatpush.bf16.xpose.msra.mxu0 0
        %1753 = vmatpush.bf16.xpose.msra.mxu0 0
        %1754 = vmatpush.bf16.xpose.msra.mxu0 0
        %1755 = vmatpush.bf16.xpose.msra.mxu0 0
        %1756 = vmatpush.bf16.xpose.msra.mxu0 0
        %1757 = vmatpush.bf16.xpose.msra.mxu0 %v1748
        %1758 = vmatmul.bf16.gmra.mxu0 %v1745
        %v1759 = vpop.f32.mrf.mxu0
        %v1760 = vadd.f32 %v1002, %v1759
        %v1761 = vpop.f32.mrf.mxu0
        %1762 = vdwg.mxu0
        %v1763 = vsel %vm1005, %v1741, -inf
        %1764 = vmax.xlane.f32.xlu0 %v1763
        %v1765 = vpop.xlane.xlu0 %1764
        %v1766 = vsel %vm1005, %v1760, -inf
        %1767 = vmax.xlane.f32.xlu0 %v1766
        %v1768 = vpop.xlane.xlu0 %1767
        %v1769 = vsub.f32 %v1741, %v1765
        %v1770 = vsub.f32 %v1760, %v1768
        %v1771 = vmul.f32 %v1769, 1.442695
        %v1772 = vpow.pop %v1771
        %v1773 = vmul.f32 %v1770, 1.442695
        %v1774 = vpow.pop %v1773
        %v1775 = vsel %vm1005, %v1772, 0.0
        %1776 = vadd.xlane.f32.xlu0 %v1775
        %v1777 = vpop.xlane.xlu0 %1776
        %v1778 = vsel %vm1005, %v1774, 0.0
        %1779 = vadd.xlane.f32.xlu0 %v1778
        %v1780 = vpop.xlane.xlu0 %1779
        %v1781 = vrcp.pop %v1777
        %v1782 = vrcp.pop %v1780
        %v1783 = vpack.c.bf16 %v1772, %v1772
        %v1784 = vpack.c.bf16 %v1774, %v1774
        %v1786 = vsel %vm1005, %v1783, 0
        %v1789 = vsel %vm1069, %v1723, 0
        %1791 = vmatpush.bf16.msra.mxu0 0
        %1792 = vmatpush.bf16.msra.mxu0 0
        %1793 = vmatpush.bf16.msra.mxu0 0
        %1794 = vmatpush.bf16.msra.mxu0 0
        %1795 = vmatpush.bf16.msra.mxu0 0
        %1796 = vmatpush.bf16.msra.mxu0 0
        %1797 = vmatpush.bf16.msra.mxu0 0
        %1798 = vmatpush.bf16.msra.mxu0 %v1789
        %1799 = vmatmul.bf16.gmra.mxu0 %v1786
        %v1800 = vpop.f32.mrf.mxu0
        %v1801 = vadd.f32 0.0, %v1800
        %v1802 = vpop.f32.mrf.mxu0
        %1803 = vdwg.mxu0
        %v1805 = vsel %vm1005, %v1784, 0
        %v1808 = vsel %vm1069, %v1724, 0
        %1810 = vmatpush.bf16.msra.mxu0 0
        %1811 = vmatpush.bf16.msra.mxu0 0
        %1812 = vmatpush.bf16.msra.mxu0 0
        %1813 = vmatpush.bf16.msra.mxu0 0
        %1814 = vmatpush.bf16.msra.mxu0 0
        %1815 = vmatpush.bf16.msra.mxu0 0
        %1816 = vmatpush.bf16.msra.mxu0 0
        %1817 = vmatpush.bf16.msra.mxu0 %v1808
        %1818 = vmatmul.bf16.gmra.mxu0 %v1805
        %v1819 = vpop.f32.mrf.mxu0
        %v1820 = vadd.f32 0.0, %v1819
        %v1821 = vpop.f32.mrf.mxu0
        %1822 = vdwg.mxu0
        %v1823 = vmul.f32 %v1801, %v1781
        %v1824 = vmul.f32 %v1820, %v1782
        %v1825 = vpack.c.bf16 %v1824, %v1823
        %s1826 = scalar_lea.vmem %s837, 12
        %v1827 = vld [vmem:[%s1826] sm:$0xf]
        %v1829 = vsel %vm1005, %v1825, 0
        %v1832 = vsel %vm1069, %v1827, 0
        %1834 = vmatpush.bf16.msra.mxu0 0
        %1835 = vmatpush.bf16.msra.mxu0 0
        %1836 = vmatpush.bf16.msra.mxu0 0
        %1837 = vmatpush.bf16.msra.mxu0 0
        %1838 = vmatpush.bf16.msra.mxu0 0
        %1839 = vmatpush.bf16.msra.mxu0 0
        %1840 = vmatpush.bf16.msra.mxu0 0
        %1841 = vmatpush.bf16.msra.mxu0 %v1832
        %1842 = vmatmul.bf16.gmra.mxu0 %v1829
        %v1843 = vpop.f32.mrf.mxu0
        %v1844 = vadd.f32 0.0, %v1843
        %v1845 = vpop.f32.mrf.mxu0
        %v1846 = vadd.f32 0.0, %v1845
        %1847 = vdwg.mxu0
        %v1848 = vadd.f32 %v1607, %v1844
        %v1849 = vadd.f32 %v1608, %v1846
        %v1850 = vld [vmem:[%s840] sm:$0x1]
        %v1852 = vperm.slane %v1850, 0
        %v1854 = vadd.f32 %v1848, %v1852
        %v1855 = vadd.f32 %v1849, %v1852
        %v1856 = vadd.f32 %v880, %v1854
        %v1857 = vadd.f32 %v881, %v1855
        %v1858 = vsel %vm905, %v1856, 0.0
        %1859 = vadd.xlane.f32.xlu0 %v1858
        %v1860 = vpop.xlane.xlu0 %1859
        %v1861 = vsel %vm905, %v1857, 0.0
        %1862 = vadd.xlane.f32.xlu0 %v1861
        %v1863 = vpop.xlane.xlu0 %1862
        %v1864 = vrcp.pop 32.0
        %v1865 = vmul.f32 32.0, %v1864
        %v1866 = vsub.f32 1.0, %v1865
        %v1867 = vmul.f32 %v1864, %v1866
        %v1868 = vadd.f32 %v1864, %v1867
        %vm1869 = vweird.f32 %v1864
        %v1870 = vsel %vm1869, %v1864, %v1868
        %v1871 = vmul.f32 %v1860, %v1870
        %v1872 = vmul.f32 %v1863, %v1870
        %v1873 = vsub.f32 %v1856, %v1871
        %v1874 = vsub.f32 %v1857, %v1872
        %v1875 = vmul.f32 %v1873, %v1873
        %v1876 = vmul.f32 %v1874, %v1874
        %v1877 = vsel %vm905, %v1875, 0.0
        %1878 = vadd.xlane.f32.xlu0 %v1877
        %v1879 = vpop.xlane.xlu0 %1878
        %v1880 = vsel %vm905, %v1876, 0.0
        %1881 = vadd.xlane.f32.xlu0 %v1880
        %v1882 = vpop.xlane.xlu0 %1881
        %v1883 = vmul.f32 %v1879, %v1870
        %v1884 = vmul.f32 %v1882, %v1870
        %v1885 = vadd.f32 %v1883, 1e-05
        %v1886 = vadd.f32 %v1884, 1e-05
        %v1887 = vrsqrt.pop %v1885
        %v1888 = vmul.f32 %v1887, %v1885
        %v1889 = vmul.f32 %v1888, %v1887
        %v1890 = vmul.f32 0.5, %v1889
        %v1891 = vsub.f32 1.5, %v1890
        %v1892 = vmul.f32 %v1887, %v1891
        %vm1893 = vweird.f32 %v1885
        %vm1894 = vweird.f32 %v1887
        %vm1895 = vmor %vm1893, %vm1894
        %v1896 = vsel %vm1895, %v1887, %v1892
        %v1897 = vrsqrt.pop %v1886
        %v1898 = vmul.f32 %v1897, %v1886
        %v1899 = vmul.f32 %v1898, %v1897
        %v1900 = vmul.f32 0.5, %v1899
        %v1901 = vsub.f32 1.5, %v1900
        %v1902 = vmul.f32 %v1897, %v1901
        %vm1903 = vweird.f32 %v1886
        %vm1904 = vweird.f32 %v1897
        %vm1905 = vmor %vm1903, %vm1904
        %v1906 = vsel %vm1905, %v1897, %v1902
        %v1907 = vmul.f32 %v1873, %v1896
        %v1908 = vmul.f32 %v1874, %v1906
        %v1909 = vld [vmem:[%s843] sm:$0x1]
        %v1911 = vperm.slane %v1909, 0
        %v1913 = vmul.f32 %v1907, %v1911
        %v1914 = vmul.f32 %v1908, %v1911
        %v1915 = vld [vmem:[%s846] sm:$0x1]
        %v1917 = vperm.slane %v1915, 0
        %v1919 = vadd.f32 %v1913, %v1917
        %v1920 = vadd.f32 %v1914, %v1917
        %v1921 = vpack.c.bf16 %v1920, %v1919
        %v1922 = vld [vmem:[%s851] sm:$0xf]
        %v1923 = vld [vmem:[%s851 + $0x4] sm:$0xf]
        %v1924 = vld [vmem:[%s851 + $0x8] sm:$0xf]
        %v1925 = vld [vmem:[%s851 + $0xc] sm:$0xf]
        %v1926 = vld [vmem:[%s854] sm:$0x1]
        %v1928 = vperm.slane %v1926, 0
        %v1934 = vunpack.c.l.b16 %v1922
        %v1935 = vunpack.c.l.b16 %v1923
        %v1936 = vunpack.c.l.b16 %v1924
        %v1937 = vunpack.c.l.b16 %v1925
        %v1938 = vpack.c.b16 %v1935, %v1934
        %v1939 = vpack.c.b16 %v1937, %v1936
        %v1943 = vsel %vm905, %v1921, 0
        %1945 = vmatpush.bf16.msra.mxu0 0
        %1946 = vmatpush.bf16.msra.mxu0 0
        %1947 = vmatpush.bf16.msra.mxu0 0
        %1948 = vmatpush.bf16.msra.mxu0 0
        %1949 = vmatpush.bf16.msra.mxu0 0
        %1950 = vmatpush.bf16.msra.mxu0 0
        %1951 = vmatpush.bf16.msra.mxu0 %v1939
        %1952 = vmatpush.bf16.msra.mxu0 %v1938
        %1953 = vmatmul.bf16.gmra.mxu0 %v1943
        %v1954 = vpop.f32.mrf.mxu0
        %v1955 = vadd.f32 %v1928, %v1954
        %v1956 = vpop.f32.mrf.mxu0
        %v1957 = vadd.f32 %v1928, %v1956
        %1958 = vdwg.mxu0
        %v1959 = vmax.f32 %v1955, 0.0
        %v1960 = vmax.f32 %v1957, 0.0
        %v1961 = vpack.c.bf16 %v1960, %v1959
        %v1962 = vld [vmem:[%s859] sm:$0xf]
        %v1963 = vld [vmem:[%s859 + $0x4] sm:$0xf]
        %v1964 = vld [vmem:[%s859 + $0x8] sm:$0xf]
        %v1965 = vld [vmem:[%s859 + $0xc] sm:$0xf]
        %v1966 = vld [vmem:[%s859 + $0x10] sm:$0xf]
        %v1967 = vld [vmem:[%s859 + $0x14] sm:$0xf]
        %v1968 = vld [vmem:[%s859 + $0x18] sm:$0xf]
        %v1969 = vld [vmem:[%s859 + $0x1c] sm:$0xf]
        %v1970 = vld [vmem:[%s862] sm:$0x1]
        %v1972 = vperm.slane %v1970, 0
        %v1982 = vunpack.c.l.b16 %v1962
        %v1983 = vunpack.c.l.b16 %v1963
        %v1984 = vunpack.c.l.b16 %v1964
        %v1985 = vunpack.c.l.b16 %v1965
        %v1986 = vunpack.c.l.b16 %v1966
        %v1987 = vunpack.c.l.b16 %v1967
        %v1988 = vunpack.c.l.b16 %v1968
        %v1989 = vunpack.c.l.b16 %v1969
        %v1990 = vpack.c.b16 %v1983, %v1982
        %v1991 = vpack.c.b16 %v1985, %v1984
        %v1992 = vpack.c.b16 %v1987, %v1986
        %v1993 = vpack.c.b16 %v1989, %v1988
        %vm1998 = vcmask 523264
        %v2000 = vsel %vm1998, %v1961, 0
        %2002 = vmatpush.bf16.msra.mxu0 0
        %2003 = vmatpush.bf16.msra.mxu0 0
        %2004 = vmatpush.bf16.msra.mxu0 0
        %2005 = vmatpush.bf16.msra.mxu0 0
        %2006 = vmatpush.bf16.msra.mxu0 %v1993
        %2007 = vmatpush.bf16.msra.mxu0 %v1992
        %2008 = vmatpush.bf16.msra.mxu0 %v1991
        %2009 = vmatpush.bf16.msra.mxu0 %v1990
        %2010 = vmatmul.bf16.gmra.mxu0 %v2000
        %v2011 = vpop.f32.mrf.mxu0
        %v2012 = vadd.f32 %v1972, %v2011
        %v2013 = vpop.f32.mrf.mxu0
        %v2014 = vadd.f32 %v1972, %v2013
        %2015 = vdwg.mxu0
        %v2016 = vadd.f32 %v1919, %v2012
        %v2017 = vadd.f32 %v1920, %v2014
        %v2018 = vsel %vm905, %v2016, 0.0
        %2019 = vadd.xlane.f32.xlu0 %v2018
        %v2020 = vpop.xlane.xlu0 %2019
        %v2021 = vsel %vm905, %v2017, 0.0
        %2022 = vadd.xlane.f32.xlu0 %v2021
        %v2023 = vpop.xlane.xlu0 %2022
        %v2024 = vmul.f32 %v2020, %v1870
        %v2025 = vmul.f32 %v2023, %v1870
        %v2026 = vsub.f32 %v2016, %v2024
        %v2027 = vsub.f32 %v2017, %v2025
        %v2028 = vmul.f32 %v2026, %v2026
        %v2029 = vmul.f32 %v2027, %v2027
        %v2030 = vsel %vm905, %v2028, 0.0
        %2031 = vadd.xlane.f32.xlu0 %v2030
        %v2032 = vpop.xlane.xlu0 %2031
        %v2033 = vsel %vm905, %v2029, 0.0
        %2034 = vadd.xlane.f32.xlu0 %v2033
        %v2035 = vpop.xlane.xlu0 %2034
        %v2036 = vmul.f32 %v2032, %v1870
        %v2037 = vmul.f32 %v2035, %v1870
        %v2038 = vadd.f32 %v2036, 1e-05
        %v2039 = vadd.f32 %v2037, 1e-05
        %v2040 = vrsqrt.pop %v2038
        %v2041 = vmul.f32 %v2040, %v2038
        %v2042 = vmul.f32 %v2041, %v2040
        %v2043 = vmul.f32 0.5, %v2042
        %v2044 = vsub.f32 1.5, %v2043
        %v2045 = vmul.f32 %v2040, %v2044
        %vm2046 = vweird.f32 %v2038
        %vm2047 = vweird.f32 %v2040
        %vm2048 = vmor %vm2046, %vm2047
        %v2049 = vsel %vm2048, %v2040, %v2045
        %v2050 = vrsqrt.pop %v2039
        %v2051 = vmul.f32 %v2050, %v2039
        %v2052 = vmul.f32 %v2051, %v2050
        %v2053 = vmul.f32 0.5, %v2052
        %v2054 = vsub.f32 1.5, %v2053
        %v2055 = vmul.f32 %v2050, %v2054
        %vm2056 = vweird.f32 %v2039
        %vm2057 = vweird.f32 %v2050
        %vm2058 = vmor %vm2056, %vm2057
        %v2059 = vsel %vm2058, %v2050, %v2055
        %v2060 = vmul.f32 %v2026, %v2049
        %v2061 = vmul.f32 %v2027, %v2059
        %v2062 = vld [vmem:[%s865] sm:$0x1]
        %v2064 = vperm.slane %v2062, 0
        %v2066 = vmul.f32 %v2060, %v2064
        %v2067 = vmul.f32 %v2061, %v2064
        %v2068 = vld [vmem:[%s868] sm:$0x1]
        %v2070 = vperm.slane %v2068, 0
        %v2072 = vadd.f32 %v2066, %v2070
        %v2073 = vadd.f32 %v2067, %v2070
        %2074 = vst.msk [vmem:[#allocation2] sm:$0xff] %vm905, %v2072
        %2075 = vst.msk [vmem:[#allocation2 + $0x8] sm:$0xff] %vm905, %v2073
        // Predicated region
        $region97: #{tpu_custom_call.1} parent=91 // pred_check
          %p2076 = pneg %p528
        $region98: #{tpu_custom_call.1} parent=91 // pred_check_branch
          %2078 = sbr.rel (%p2076) target = $region100
        $region99: #{tpu_custom_call.1} parent=91 // pred_region
          %s2079 = smul.u32 2, %s34
          %2081 = vsyncadd [#allocation3], 0
          %s2082 = smul.addr %s2079, 8
          %s2083 = scalar_lea.hbm %s18, %s2082
          %s2084 = sshll.u32 [#allocation2], 4
          %s2085 = int_to_ptr.vmem [resolvable:$true] %s2084
          %s2086 = sshll.u32 %s2083, 4
          %s2087 = int_to_ptr.hbm [resolvable:$true] %s2086
          %2092 = dma.vmem_to_hbm [thread:$0]  %s2085, 256, %s2087, [#allocation3], 128, 128, 8
        $region100: #{tpu_custom_call.1} parent=91 // pred_fallthru
          _
        // Predicated region
        $region101: #{tpu_custom_call.1} parent=91 // pred_check
          %p2093 = pneg %p528
        $region102: #{tpu_custom_call.1} parent=91 // pred_check_branch
          %2095 = sbr.rel (%p2093) target = $region104
        $region103: #{tpu_custom_call.1} parent=91 // pred_region
          %2097 = dma.done [#allocation3], 256
        $region104: #{tpu_custom_call.1} parent=91 // pred_fallthru
          _
      $region92: #{tpu_custom_call.1} parent=5 // pred_fallthru
        _
      %p2098 = scmp.le.s32.totalorder 2, %s25
      // Predicated region
      $region105: #{tpu_custom_call.1} parent=5 // pred_check
        %p2099 = pneg %p2098
      $region106: #{tpu_custom_call.1} parent=5 // pred_check_branch
        %2101 = sbr.rel (%p2099) target = $region108
      $region107: #{tpu_custom_call.1} parent=5 // pred_region
        %s2102 = ssub.s32 %s25, 2
      $region108: #{tpu_custom_call.1} parent=5 // pred_fallthru
        _
    $region6: #{tpu_custom_call.1} parent=1 // loop_footer
      %s29 = sadd.s32 1, %s25
    $region7: #{tpu_custom_call.1} parent=1 // loop_footer_branch
      %24 = sbr.rel target = $region3
    $region8: #{tpu_custom_call.1} parent=1 // loop_exit
      _
    %2103 = vsyncpa [#allocation3], 1
    %s2104 = scalar_lea.sflag [#allocation3], 1
    %2105 = vsyncpa %s2104, 1

</llo_original>
